<compile_context>
chip_gen: v7x
topology: tpu7x:2x2x1
jax: 0.10.0
libtpu: 0.0.40
codegen_flags: <defaults>
</compile_context>

<pallas_src>
import functools

import numpy as np
import jax
import jax.numpy as jnp
from jax.experimental import pallas as pl
from jax.experimental.pallas import tpu as pltpu


# -----------------------------------------------------------------------------
# Phase 1: LSTM recurrence (TT timesteps per grid step, h/c carried in scratch)
# -----------------------------------------------------------------------------
def lstm_scan_kernel(x_ref, m_ref, wx_ref, wh_ref, b_ref, h_out_ref,
                     ht_ref, ct_ref):
    @pl.when(pl.program_id(1) == 0)          # new batch block -> zero the state
    def _():
        ht_ref[...] = jnp.zeros_like(ht_ref)
        ct_ref[...] = jnp.zeros_like(ct_ref)

    wx = wx_ref[...]                          # (E, 4H)  bf16
    wh = wh_ref[...]                          # (H, 4H)  bf16
    h_dim = ht_ref.shape[1]
    bb = ht_ref.shape[0]
    n_steps = x_ref.shape[0]
    # Hoist the bias broadcast out of the unrolled loop (not CSE'd otherwise).
    bias = jnp.broadcast_to(b_ref[...], (bb, 4 * h_dim))   # (BB, 4H) f32

    def step(ti, carry):
        h_prev, c_prev = carry                # (BB, H) f32
        x_t = x_ref[ti]                       # (BB, E) bf16
        m_t = m_ref[ti]                       # (BB, 1) f32
        gates = (jnp.dot(x_t, wx, preferred_element_type=jnp.float32)
                 + jnp.dot(h_prev.astype(jnp.bfloat16), wh,
                           preferred_element_type=jnp.float32)
                 + bias)                      # (BB, 4H) f32, gate order i,f,g,o
        i_g = jax.nn.sigmoid(gates[:, 0 * h_dim:1 * h_dim])
        f_g = jax.nn.sigmoid(gates[:, 1 * h_dim:2 * h_dim])
        g_g = jnp.tanh(gates[:, 2 * h_dim:3 * h_dim])
        o_g = jax.nn.sigmoid(gates[:, 3 * h_dim:4 * h_dim])
        c_new = f_g * c_prev + i_g * g_g
        h_new = o_g * jnp.tanh(c_new)
        # mask-gated state carry (masked steps keep the previous state)
        c_t = m_t * c_new + (1.0 - m_t) * c_prev
        h_t = m_t * h_new + (1.0 - m_t) * h_prev
        h_out_ref[ti] = h_t.astype(h_out_ref.dtype)
        return h_t, c_t

    h_f, c_f = jax.lax.fori_loop(0, n_steps, step,
                                 (ht_ref[...], ct_ref[...]), unroll=True)
    ht_ref[...] = h_f
    ct_ref[...] = c_f


# -----------------------------------------------------------------------------
# Phase 2: batched readout + tied decoder + online log-sum-exp + int-target NLL
# -----------------------------------------------------------------------------
def decoder_loss_kernel(h_ref, y_ref, m_ref, wr_ref, br_ref, wd_ref, bd_ref,
                        loss_ref, out_sc, max_sc, den_sc, tgt_sc, *, tn, inv_bn):
    vj = pl.program_id(1)

    @pl.when(vj == 0)
    def _():
        ro = (jnp.dot(h_ref[...], wr_ref[...],
                      preferred_element_type=jnp.float32) + br_ref[...])
        out_sc[...] = ro.astype(out_sc.dtype)            # bf16 for the MXU
        max_sc[...] = jnp.full_like(max_sc, -jnp.inf)
        den_sc[...] = jnp.zeros_like(den_sc)
        tgt_sc[...] = jnp.zeros_like(tgt_sc)

    logits = (jnp.dot(out_sc[...], wd_ref[...],
                      preferred_element_type=jnp.float32)
              + bd_ref[...])                              # (TM, TN) f32

    # exact online log-sum-exp over vocab tiles
    m_prev = max_sc[...]
    m_new = jnp.maximum(m_prev, jnp.max(logits, axis=-1, keepdims=True))
    den_sc[...] = (den_sc[...] * jnp.exp(m_prev - m_new)
                   + jnp.sum(jnp.exp(logits - m_new), axis=-1, keepdims=True))
    max_sc[...] = m_new

    # target logit via iota == y (no one-hot); target lies in exactly one tile
    cols = jax.lax.broadcasted_iota(jnp.int32, logits.shape, 1) + vj * tn
    tgt_sc[...] += jnp.sum(jnp.where(cols == y_ref[...], logits, 0.0),
                           axis=-1, keepdims=True)

    @pl.when(vj == pl.num_programs(1) - 1)
    def _():
        nll = (max_sc[...] + jnp.log(den_sc[...])) - tgt_sc[...]   # (TM, 1)
        loss_ref[...] = (jnp.sum(nll * m_ref[...]) * inv_bn).reshape(1, 1)


# -----------------------------------------------------------------------------
# Wrapper
# -----------------------------------------------------------------------------
def lm_loss_pallas(x_emb, x_mask, y_data, params, *, tt=8, tm=128, tn=128):
    """LM.forward loss. x_emb (Tx,Bn,E) f32, x_mask (Tx,Bn) f32, y_data (Tx,Bn) i32."""
    Tx, Bn, E = x_emb.shape
    H = params["wh"].shape[0]
    V = params["wd"].shape[1]

    # bf16 matmul operands; biases stay f32
    wx = params["wx"].astype(jnp.bfloat16)
    wh = params["wh"].astype(jnp.bfloat16)
    b = params["b"].astype(jnp.float32)
    wr = params["wr"].astype(jnp.bfloat16)
    br = params["br"].astype(jnp.float32)
    wd = params["wd"].astype(jnp.bfloat16)
    bd = params["bd"].astype(jnp.float32)

    # ---- phase 1: pad time to a multiple of tt (padded steps have mask 0) ----
    tt = min(tt, Tx)
    tx_pad = pl.cdiv(Tx, tt) * tt
    if tx_pad != Tx:
        pad = tx_pad - Tx
        x_emb = jnp.pad(x_emb, ((0, pad), (0, 0), (0, 0)))
        x_mask = jnp.pad(x_mask, ((0, pad), (0, 0)))
        y_data = jnp.pad(y_data, ((0, pad), (0, 0)))

    bb = 8 if Bn % 8 == 0 else Bn            # batch block (parallel grid axis)
    nb = Bn // bb
    nt = tx_pad // tt

    x_emb16 = x_emb.astype(jnp.bfloat16)
    mask3 = x_mask.astype(jnp.float32)[:, :, None]      # (tx_pad, Bn, 1)

    h_all = pl.pallas_call(
        lstm_scan_kernel,
        out_shape=jax.ShapeDtypeStruct((tx_pad, Bn, H), jnp.bfloat16),
        grid_spec=pltpu.PrefetchScalarGridSpec(
            num_scalar_prefetch=0,
            grid=(nb, nt),
            in_specs=[
                pl.BlockSpec((tt, bb, E), lambda bi, ti: (ti, bi, 0)),   # x_emb
                pl.BlockSpec((tt, bb, 1), lambda bi, ti: (ti, bi, 0)),   # mask
                pl.BlockSpec((E, 4 * H), lambda bi, ti: (0, 0)),         # Wx
                pl.BlockSpec((H, 4 * H), lambda bi, ti: (0, 0)),         # Wh
                pl.BlockSpec((1, 4 * H), lambda bi, ti: (0, 0)),         # bias
            ],
            out_specs=pl.BlockSpec((tt, bb, H), lambda bi, ti: (ti, bi, 0)),
            scratch_shapes=[pltpu.VMEM((bb, H), jnp.float32),            # h carry
                            pltpu.VMEM((bb, H), jnp.float32)],           # c carry
        ),
        compiler_params=pltpu.CompilerParams(
            dimension_semantics=("parallel", "arbitrary")),
    )(x_emb16, mask3, wx, wh, b)

    # ---- phase 2: flatten rows, pad to the row tile, run batched decoder -----
    n_rows = tx_pad * Bn
    tm = min(tm, n_rows)
    n_rows_pad = pl.cdiv(n_rows, tm) * tm
    tn = min(tn, V)
    assert V % tn == 0, "vocab must be a multiple of the vocab tile"

    h_flat = h_all.reshape(n_rows, H)
    y_flat = y_data.reshape(n_rows, 1).astype(jnp.int32)
    m_flat = x_mask.reshape(n_rows, 1).astype(jnp.float32)
    if n_rows_pad != n_rows:                 # padded rows have mask 0 -> 0 loss
        pad = n_rows_pad - n_rows
        h_flat = jnp.pad(h_flat, ((0, pad), (0, 0)))
        y_flat = jnp.pad(y_flat, ((0, pad), (0, 0)))
        m_flat = jnp.pad(m_flat, ((0, pad), (0, 0)))

    n_row_tiles = n_rows_pad // tm
    n_voc_tiles = V // tn

    partial = pl.pallas_call(
        functools.partial(decoder_loss_kernel, tn=tn, inv_bn=1.0 / Bn),
        out_shape=jax.ShapeDtypeStruct((n_row_tiles, 1), jnp.float32),
        grid_spec=pltpu.PrefetchScalarGridSpec(
            num_scalar_prefetch=0,
            grid=(n_row_tiles, n_voc_tiles),
            in_specs=[
                pl.BlockSpec((tm, H), lambda i, v: (i, 0)),    # h rows (bf16)
                pl.BlockSpec((tm, 1), lambda i, v: (i, 0)),    # int32 targets
                pl.BlockSpec((tm, 1), lambda i, v: (i, 0)),    # loss mask
                pl.BlockSpec((H, E), lambda i, v: (0, 0)),     # readout W
                pl.BlockSpec((1, E), lambda i, v: (0, 0)),     # readout b
                pl.BlockSpec((E, tn), lambda i, v: (0, v)),    # tied dec W tile
                pl.BlockSpec((1, tn), lambda i, v: (0, v)),    # dec b tile
            ],
            out_specs=pl.BlockSpec((1, 1), lambda i, v: (i, 0)),
            scratch_shapes=[pltpu.VMEM((tm, E), jnp.bfloat16),  # readout out
                            pltpu.VMEM((tm, 1), jnp.float32),   # running max
                            pltpu.VMEM((tm, 1), jnp.float32),   # running denom
                            pltpu.VMEM((tm, 1), jnp.float32)],  # target logit
        ),
        compiler_params=pltpu.CompilerParams(
            dimension_semantics=("parallel", "arbitrary")),
    )(h_flat, y_flat, m_flat, wr, br, wd, bd)

    return jnp.sum(partial)                  # sum per-row-tile partial losses


# -----------------------------------------------------------------------------
# Pure-JAX reference mirroring LM.forward's python loop (f32 throughout)
# -----------------------------------------------------------------------------
def lm_loss_ref(x_emb, x_mask, y_data, params):
    Tx, Bn, E = x_emb.shape
    H = params["wh"].shape[0]
    ht = jnp.zeros((Bn, H), jnp.float32)
    ct = jnp.zeros((Bn, H), jnp.float32)
    loss = jnp.float32(0.0)
    for t in range(Tx):
        m = x_mask[t][:, None]
        gates = x_emb[t] @ params["wx"] + ht @ params["wh"] + params["b"]
        i_g = jax.nn.sigmoid(gates[:, 0 * H:1 * H])
        f_g = jax.nn.sigmoid(gates[:, 1 * H:2 * H])
        g_g = jnp.tanh(gates[:, 2 * H:3 * H])
        o_g = jax.nn.sigmoid(gates[:, 3 * H:4 * H])
        c_new = f_g * ct + i_g * g_g
        h_new = o_g * jnp.tanh(c_new)
        ct = m * c_new + (1.0 - m) * ct
        ht = m * h_new + (1.0 - m) * ht
        out = ht @ params["wr"] + params["br"]
        logit = out @ params["wd"] + params["bd"]
        logp = jax.nn.log_softmax(logit, axis=-1)
        nll = -jnp.take_along_axis(logp, y_data[t][:, None], axis=-1)[:, 0]
        loss = loss + jnp.sum(nll * x_mask[t]) / Bn
    return loss


if __name__ == "__main__":
    # Small shapes consistent with the module: seq len 9 -> Tx=8, batch 8,
    # dim_wemb=32, dim_enc=128 (lane-aligned gate slices), vocab=256 (2 V tiles).
    T_total, Bn = 9, 8
    E, H, V = 32, 128, 256
    Tx = T_total - 1

    key = jax.random.PRNGKey(0)
    k_emb, k_wx, k_wh, k_b, k_wr, k_br, k_bd, k_data, k_mask = jax.random.split(key, 9)

    w_emb = 0.1 * jax.random.normal(k_emb, (V, E), jnp.float32)  # embedding (tied)
    params = {
        "wx": 0.1 * jax.random.normal(k_wx, (E, 4 * H), jnp.float32),
        "wh": 0.1 * jax.random.normal(k_wh, (H, 4 * H), jnp.float32),
        "b": 0.1 * jax.random.normal(k_b, (1, 4 * H), jnp.float32),
        "wr": 0.1 * jax.random.normal(k_wr, (H, E), jnp.float32),
        "br": 0.1 * jax.random.normal(k_br, (1, E), jnp.float32),
        "wd": jnp.transpose(w_emb),                     # (E, V) tied decoder weight
        "bd": 0.1 * jax.random.normal(k_bd, (1, V), jnp.float32),
    }

    data = jax.random.randint(k_data, (T_total, Bn), 0, V, dtype=jnp.int32)
    mask = (jax.random.uniform(k_mask, (T_total, Bn)) > 0.2).astype(jnp.float32)

    # forward(): x = data[:-1], y = data[1:], x_mask = y_mask = mask[1:]
    x_data = data[:-1]
    y_data = data[1:]
    xy_mask = mask[1:]

    x_emb = w_emb[x_data]                               # (Tx, Bn, E) gather (glue)

    loss = lm_loss_pallas(x_emb, xy_mask, y_data, params)
    loss = jax.block_until_ready(loss)

    loss_ref = lm_loss_ref(x_emb, xy_mask, y_data, params)
    # bf16 matmul operands in the kernel -> slightly looser tolerance vs f32 ref.
    np.testing.assert_allclose(np.asarray(loss), np.asarray(loss_ref),
                               rtol=2e-2, atol=1e-2)

    print("KERNEL_OK")
</pallas_src>

<mosaic_0001>
module attributes {stable_mosaic.version = 11 : i64} {
  func.func @lstm_scan_kernel(%arg0: i32, %arg1: i32, %arg2: memref<8x8x32xbf16, #tpu.memory_space<vmem>>, %arg3: memref<8x8x1xf32, #tpu.memory_space<vmem>>, %arg4: memref<32x512xbf16, #tpu.memory_space<vmem>>, %arg5: memref<128x512xbf16, #tpu.memory_space<vmem>>, %arg6: memref<1x512xf32, #tpu.memory_space<vmem>>, %arg7: memref<8x8x128xbf16, #tpu.memory_space<vmem>>, %arg8: memref<8x128xf32, #tpu.memory_space<vmem>>, %arg9: memref<8x128xf32, #tpu.memory_space<vmem>>) attributes {dimension_semantics = [#tpu.dimension_semantics<parallel>, #tpu.dimension_semantics<arbitrary>], iteration_bounds = array<i64: 1, 1>, scalar_prefetch = 0 : i64, scratch_operands = 2 : i64, tpu.core_type = #tpu.core_type<tc>, window_params = [{transform_indices = @transform_0, window_bounds = array<i64: 8, 8, 32>}, {transform_indices = @transform_1, window_bounds = array<i64: 8, 8, 1>}, {pipeline_mode = #tpu.pipeline_mode<synchronous>, transform_indices = @transform_2, window_bounds = array<i64: 32, 512>}, {pipeline_mode = #tpu.pipeline_mode<synchronous>, transform_indices = @transform_3, window_bounds = array<i64: 128, 512>}, {pipeline_mode = #tpu.pipeline_mode<synchronous>, transform_indices = @transform_4, window_bounds = array<i64: 1, 512>}, {transform_indices = @transform_5, window_bounds = array<i64: 8, 8, 128>}]} {
    %c0_i32 = arith.constant 0 : i32
    %0 = arith.cmpi eq, %arg1, %c0_i32 : i32
    %1 = arith.extui %0 : i1 to i32
    %c0_i32_0 = arith.constant 0 : i32
    %2 = arith.cmpi ne, %1, %c0_i32_0 : i32
    scf.if %2 {
      %cst_118 = arith.constant 0.000000e+00 : f32
      %452 = vector.broadcast %cst_118 : f32 to vector<8x128xf32>
      %c0_119 = arith.constant 0 : index
      %c0_120 = arith.constant 0 : index
      %453 = vector.load %arg8[%c0_119, %c0_120] : memref<8x128xf32, #tpu.memory_space<vmem>>, vector<8x128xf32>
      tpu.vector_store %arg8[%c0_119, %c0_120], %452 {strides = array<i32>} : memref<8x128xf32, #tpu.memory_space<vmem>>, vector<8x128xf32>,
      %cst_121 = arith.constant 0.000000e+00 : f32
      %454 = vector.broadcast %cst_121 : f32 to vector<8x128xf32>
      %c0_122 = arith.constant 0 : index
      %c0_123 = arith.constant 0 : index
      %455 = vector.load %arg9[%c0_122, %c0_123] : memref<8x128xf32, #tpu.memory_space<vmem>>, vector<8x128xf32>
      tpu.vector_store %arg9[%c0_122, %c0_123], %454 {strides = array<i32>} : memref<8x128xf32, #tpu.memory_space<vmem>>, vector<8x128xf32>,
    } else {
    }
    %c0 = arith.constant 0 : index
    %c0_1 = arith.constant 0 : index
    %3 = vector.load %arg4[%c0, %c0_1] : memref<32x512xbf16, #tpu.memory_space<vmem>>, vector<32x512xbf16>
    %c0_2 = arith.constant 0 : index
    %c0_3 = arith.constant 0 : index
    %4 = vector.load %arg5[%c0_2, %c0_3] : memref<128x512xbf16, #tpu.memory_space<vmem>>, vector<128x512xbf16>
    %c0_4 = arith.constant 0 : index
    %c0_5 = arith.constant 0 : index
    %5 = vector.load %arg6[%c0_4, %c0_5] : memref<1x512xf32, #tpu.memory_space<vmem>>, vector<1x512xf32>
    %6 = vector.shape_cast %5 : vector<1x512xf32> to vector<1x512xf32>
    %7 = vector.broadcast %6 : vector<1x512xf32> to vector<8x512xf32>
    %c0_6 = arith.constant 0 : index
    %c0_7 = arith.constant 0 : index
    %8 = vector.load %arg8[%c0_6, %c0_7] : memref<8x128xf32, #tpu.memory_space<vmem>>, vector<8x128xf32>
    %c0_8 = arith.constant 0 : index
    %c0_9 = arith.constant 0 : index
    %9 = vector.load %arg9[%c0_8, %c0_9] : memref<8x128xf32, #tpu.memory_space<vmem>>, vector<8x128xf32>
    %c0_i32_10 = arith.constant 0 : i32
    %10 = arith.index_cast %c0_i32_10 : i32 to index
    %c0_11 = arith.constant 0 : index
    %c0_12 = arith.constant 0 : index
    %11 = vector.load %arg2[%10, %c0_11, %c0_12] : memref<8x8x32xbf16, #tpu.memory_space<vmem>>, vector<1x8x32xbf16>
    %12 = vector.shape_cast %11 : vector<1x8x32xbf16> to vector<8x32xbf16>
    %13 = arith.index_cast %c0_i32_10 : i32 to index
    %c0_13 = arith.constant 0 : index
    %c0_14 = arith.constant 0 : index
    %14 = vector.load %arg3[%13, %c0_13, %c0_14] : memref<8x8x1xf32, #tpu.memory_space<vmem>>, vector<1x8x1xf32>
    %15 = vector.shape_cast %14 : vector<1x8x1xf32> to vector<8x1xf32>
    %cst = arith.constant dense<0.000000e+00> : vector<8x512xf32>
    %16 = tpu.matmul %12, %3, %cst {dimension_numbers = #tpu.dot_dimension_numbers<[1], [0], [0], [1], [0, 0, 1, 1], [], []>} : vector<8x32xbf16>, vector<32x512xbf16>, vector<8x512xf32> -> vector<8x512xf32>
    %17 = arith.truncf %8 : vector<8x128xf32> to vector<8x128xbf16>
    %cst_15 = arith.constant dense<0.000000e+00> : vector<8x512xf32>
    %18 = tpu.matmul %17, %4, %cst_15 {dimension_numbers = #tpu.dot_dimension_numbers<[1], [0], [0], [1], [0, 0, 1, 1], [], []>} : vector<8x128xbf16>, vector<128x512xbf16>, vector<8x512xf32> -> vector<8x512xf32>
    %19 = arith.addf %16, %18 : vector<8x512xf32>
    %20 = arith.addf %19, %7 : vector<8x512xf32>
    %21 = vector.extract_strided_slice %20 {offsets = [0, 0], sizes = [8, 128], strides = [1, 1]} : vector<8x512xf32> to vector<8x128xf32>
    %22 = arith.negf %21 : vector<8x128xf32>
    %23 = math.exp %22 : vector<8x128xf32>
    %cst_16 = arith.constant 1.000000e+00 : f32
    %24 = vector.broadcast %cst_16 : f32 to vector<8x128xf32>
    %25 = arith.addf %24, %23 : vector<8x128xf32>
    %26 = arith.divf %24, %25 : vector<8x128xf32>
    %27 = vector.extract_strided_slice %20 {offsets = [0, 128], sizes = [8, 128], strides = [1, 1]} : vector<8x512xf32> to vector<8x128xf32>
    %28 = arith.negf %27 : vector<8x128xf32>
    %29 = math.exp %28 : vector<8x128xf32>
    %cst_17 = arith.constant 1.000000e+00 : f32
    %30 = vector.broadcast %cst_17 : f32 to vector<8x128xf32>
    %31 = arith.addf %30, %29 : vector<8x128xf32>
    %32 = arith.divf %30, %31 : vector<8x128xf32>
    %33 = vector.extract_strided_slice %20 {offsets = [0, 256], sizes = [8, 128], strides = [1, 1]} : vector<8x512xf32> to vector<8x128xf32>
    %34 = math.tanh %33 : vector<8x128xf32>
    %35 = vector.extract_strided_slice %20 {offsets = [0, 384], sizes = [8, 128], strides = [1, 1]} : vector<8x512xf32> to vector<8x128xf32>
    %36 = arith.negf %35 : vector<8x128xf32>
    %37 = math.exp %36 : vector<8x128xf32>
    %cst_18 = arith.constant 1.000000e+00 : f32
    %38 = vector.broadcast %cst_18 : f32 to vector<8x128xf32>
    %39 = arith.addf %38, %37 : vector<8x128xf32>
    %40 = arith.divf %38, %39 : vector<8x128xf32>
    %41 = arith.mulf %32, %9 : vector<8x128xf32>
    %42 = arith.mulf %26, %34 : vector<8x128xf32>
    %43 = arith.addf %41, %42 : vector<8x128xf32>
    %44 = math.tanh %43 : vector<8x128xf32>
    %45 = arith.mulf %40, %44 : vector<8x128xf32>
    %46 = vector.broadcast %15 : vector<8x1xf32> to vector<8x128xf32>
    %47 = arith.mulf %46, %43 : vector<8x128xf32>
    %cst_19 = arith.constant 1.000000e+00 : f32
    %48 = vector.broadcast %cst_19 : f32 to vector<8x1xf32>
    %49 = arith.subf %48, %15 : vector<8x1xf32>
    %50 = vector.broadcast %49 : vector<8x1xf32> to vector<8x128xf32>
    %51 = arith.mulf %50, %9 : vector<8x128xf32>
    %52 = arith.addf %47, %51 : vector<8x128xf32>
    %53 = vector.broadcast %15 : vector<8x1xf32> to vector<8x128xf32>
    %54 = arith.mulf %53, %45 : vector<8x128xf32>
    %cst_20 = arith.constant 1.000000e+00 : f32
    %55 = vector.broadcast %cst_20 : f32 to vector<8x1xf32>
    %56 = arith.subf %55, %15 : vector<8x1xf32>
    %57 = vector.broadcast %56 : vector<8x1xf32> to vector<8x128xf32>
    %58 = arith.mulf %57, %8 : vector<8x128xf32>
    %59 = arith.addf %54, %58 : vector<8x128xf32>
    %60 = arith.truncf %59 : vector<8x128xf32> to vector<8x128xbf16>
    %61 = arith.index_cast %c0_i32_10 : i32 to index
    %c0_21 = arith.constant 0 : index
    %c0_22 = arith.constant 0 : index
    %62 = vector.load %arg7[%61, %c0_21, %c0_22] : memref<8x8x128xbf16, #tpu.memory_space<vmem>>, vector<1x8x128xbf16>
    %63 = vector.shape_cast %62 : vector<1x8x128xbf16> to vector<8x128xbf16>
    %64 = vector.shape_cast %60 : vector<8x128xbf16> to vector<1x8x128xbf16>
    tpu.vector_store %arg7[%61, %c0_21, %c0_22], %64 {strides = array<i32>} : memref<8x8x128xbf16, #tpu.memory_space<vmem>>, vector<1x8x128xbf16>,
    %c1_i32 = arith.constant 1 : i32
    %65 = arith.index_cast %c1_i32 : i32 to index
    %c0_23 = arith.constant 0 : index
    %c0_24 = arith.constant 0 : index
    %66 = vector.load %arg2[%65, %c0_23, %c0_24] : memref<8x8x32xbf16, #tpu.memory_space<vmem>>, vector<1x8x32xbf16>
    %67 = vector.shape_cast %66 : vector<1x8x32xbf16> to vector<8x32xbf16>
    %68 = arith.index_cast %c1_i32 : i32 to index
    %c0_25 = arith.constant 0 : index
    %c0_26 = arith.constant 0 : index
    %69 = vector.load %arg3[%68, %c0_25, %c0_26] : memref<8x8x1xf32, #tpu.memory_space<vmem>>, vector<1x8x1xf32>
    %70 = vector.shape_cast %69 : vector<1x8x1xf32> to vector<8x1xf32>
    %cst_27 = arith.constant dense<0.000000e+00> : vector<8x512xf32>
    %71 = tpu.matmul %67, %3, %cst_27 {dimension_numbers = #tpu.dot_dimension_numbers<[1], [0], [0], [1], [0, 0, 1, 1], [], []>} : vector<8x32xbf16>, vector<32x512xbf16>, vector<8x512xf32> -> vector<8x512xf32>
    %72 = arith.truncf %59 : vector<8x128xf32> to vector<8x128xbf16>
    %cst_28 = arith.constant dense<0.000000e+00> : vector<8x512xf32>
    %73 = tpu.matmul %72, %4, %cst_28 {dimension_numbers = #tpu.dot_dimension_numbers<[1], [0], [0], [1], [0, 0, 1, 1], [], []>} : vector<8x128xbf16>, vector<128x512xbf16>, vector<8x512xf32> -> vector<8x512xf32>
    %74 = arith.addf %71, %73 : vector<8x512xf32>
    %75 = arith.addf %74, %7 : vector<8x512xf32>
    %76 = vector.extract_strided_slice %75 {offsets = [0, 0], sizes = [8, 128], strides = [1, 1]} : vector<8x512xf32> to vector<8x128xf32>
    %77 = arith.negf %76 : vector<8x128xf32>
    %78 = math.exp %77 : vector<8x128xf32>
    %cst_29 = arith.constant 1.000000e+00 : f32
    %79 = vector.broadcast %cst_29 : f32 to vector<8x128xf32>
    %80 = arith.addf %79, %78 : vector<8x128xf32>
    %81 = arith.divf %79, %80 : vector<8x128xf32>
    %82 = vector.extract_strided_slice %75 {offsets = [0, 128], sizes = [8, 128], strides = [1, 1]} : vector<8x512xf32> to vector<8x128xf32>
    %83 = arith.negf %82 : vector<8x128xf32>
    %84 = math.exp %83 : vector<8x128xf32>
    %cst_30 = arith.constant 1.000000e+00 : f32
    %85 = vector.broadcast %cst_30 : f32 to vector<8x128xf32>
    %86 = arith.addf %85, %84 : vector<8x128xf32>
    %87 = arith.divf %85, %86 : vector<8x128xf32>
    %88 = vector.extract_strided_slice %75 {offsets = [0, 256], sizes = [8, 128], strides = [1, 1]} : vector<8x512xf32> to vector<8x128xf32>
    %89 = math.tanh %88 : vector<8x128xf32>
    %90 = vector.extract_strided_slice %75 {offsets = [0, 384], sizes = [8, 128], strides = [1, 1]} : vector<8x512xf32> to vector<8x128xf32>
    %91 = arith.negf %90 : vector<8x128xf32>
    %92 = math.exp %91 : vector<8x128xf32>
    %cst_31 = arith.constant 1.000000e+00 : f32
    %93 = vector.broadcast %cst_31 : f32 to vector<8x128xf32>
    %94 = arith.addf %93, %92 : vector<8x128xf32>
    %95 = arith.divf %93, %94 : vector<8x128xf32>
    %96 = arith.mulf %87, %52 : vector<8x128xf32>
    %97 = arith.mulf %81, %89 : vector<8x128xf32>
    %98 = arith.addf %96, %97 : vector<8x128xf32>
    %99 = math.tanh %98 : vector<8x128xf32>
    %100 = arith.mulf %95, %99 : vector<8x128xf32>
    %101 = vector.broadcast %70 : vector<8x1xf32> to vector<8x128xf32>
    %102 = arith.mulf %101, %98 : vector<8x128xf32>
    %cst_32 = arith.constant 1.000000e+00 : f32
    %103 = vector.broadcast %cst_32 : f32 to vector<8x1xf32>
    %104 = arith.subf %103, %70 : vector<8x1xf32>
    %105 = vector.broadcast %104 : vector<8x1xf32> to vector<8x128xf32>
    %106 = arith.mulf %105, %52 : vector<8x128xf32>
    %107 = arith.addf %102, %106 : vector<8x128xf32>
    %108 = vector.broadcast %70 : vector<8x1xf32> to vector<8x128xf32>
    %109 = arith.mulf %108, %100 : vector<8x128xf32>
    %cst_33 = arith.constant 1.000000e+00 : f32
    %110 = vector.broadcast %cst_33 : f32 to vector<8x1xf32>
    %111 = arith.subf %110, %70 : vector<8x1xf32>
    %112 = vector.broadcast %111 : vector<8x1xf32> to vector<8x128xf32>
    %113 = arith.mulf %112, %59 : vector<8x128xf32>
    %114 = arith.addf %109, %113 : vector<8x128xf32>
    %115 = arith.truncf %114 : vector<8x128xf32> to vector<8x128xbf16>
    %116 = arith.index_cast %c1_i32 : i32 to index
    %c0_34 = arith.constant 0 : index
    %c0_35 = arith.constant 0 : index
    %117 = vector.load %arg7[%116, %c0_34, %c0_35] : memref<8x8x128xbf16, #tpu.memory_space<vmem>>, vector<1x8x128xbf16>
    %118 = vector.shape_cast %117 : vector<1x8x128xbf16> to vector<8x128xbf16>
    %119 = vector.shape_cast %115 : vector<8x128xbf16> to vector<1x8x128xbf16>
    tpu.vector_store %arg7[%116, %c0_34, %c0_35], %119 {strides = array<i32>} : memref<8x8x128xbf16, #tpu.memory_space<vmem>>, vector<1x8x128xbf16>,
    %c2_i32 = arith.constant 2 : i32
    %120 = arith.index_cast %c2_i32 : i32 to index
    %c0_36 = arith.constant 0 : index
    %c0_37 = arith.constant 0 : index
    %121 = vector.load %arg2[%120, %c0_36, %c0_37] : memref<8x8x32xbf16, #tpu.memory_space<vmem>>, vector<1x8x32xbf16>
    %122 = vector.shape_cast %121 : vector<1x8x32xbf16> to vector<8x32xbf16>
    %123 = arith.index_cast %c2_i32 : i32 to index
    %c0_38 = arith.constant 0 : index
    %c0_39 = arith.constant 0 : index
    %124 = vector.load %arg3[%123, %c0_38, %c0_39] : memref<8x8x1xf32, #tpu.memory_space<vmem>>, vector<1x8x1xf32>
    %125 = vector.shape_cast %124 : vector<1x8x1xf32> to vector<8x1xf32>
    %cst_40 = arith.constant dense<0.000000e+00> : vector<8x512xf32>
    %126 = tpu.matmul %122, %3, %cst_40 {dimension_numbers = #tpu.dot_dimension_numbers<[1], [0], [0], [1], [0, 0, 1, 1], [], []>} : vector<8x32xbf16>, vector<32x512xbf16>, vector<8x512xf32> -> vector<8x512xf32>
    %127 = arith.truncf %114 : vector<8x128xf32> to vector<8x128xbf16>
    %cst_41 = arith.constant dense<0.000000e+00> : vector<8x512xf32>
    %128 = tpu.matmul %127, %4, %cst_41 {dimension_numbers = #tpu.dot_dimension_numbers<[1], [0], [0], [1], [0, 0, 1, 1], [], []>} : vector<8x128xbf16>, vector<128x512xbf16>, vector<8x512xf32> -> vector<8x512xf32>
    %129 = arith.addf %126, %128 : vector<8x512xf32>
    %130 = arith.addf %129, %7 : vector<8x512xf32>
    %131 = vector.extract_strided_slice %130 {offsets = [0, 0], sizes = [8, 128], strides = [1, 1]} : vector<8x512xf32> to vector<8x128xf32>
    %132 = arith.negf %131 : vector<8x128xf32>
    %133 = math.exp %132 : vector<8x128xf32>
    %cst_42 = arith.constant 1.000000e+00 : f32
    %134 = vector.broadcast %cst_42 : f32 to vector<8x128xf32>
    %135 = arith.addf %134, %133 : vector<8x128xf32>
    %136 = arith.divf %134, %135 : vector<8x128xf32>
    %137 = vector.extract_strided_slice %130 {offsets = [0, 128], sizes = [8, 128], strides = [1, 1]} : vector<8x512xf32> to vector<8x128xf32>
    %138 = arith.negf %137 : vector<8x128xf32>
    %139 = math.exp %138 : vector<8x128xf32>
    %cst_43 = arith.constant 1.000000e+00 : f32
    %140 = vector.broadcast %cst_43 : f32 to vector<8x128xf32>
    %141 = arith.addf %140, %139 : vector<8x128xf32>
    %142 = arith.divf %140, %141 : vector<8x128xf32>
    %143 = vector.extract_strided_slice %130 {offsets = [0, 256], sizes = [8, 128], strides = [1, 1]} : vector<8x512xf32> to vector<8x128xf32>
    %144 = math.tanh %143 : vector<8x128xf32>
    %145 = vector.extract_strided_slice %130 {offsets = [0, 384], sizes = [8, 128], strides = [1, 1]} : vector<8x512xf32> to vector<8x128xf32>
    %146 = arith.negf %145 : vector<8x128xf32>
    %147 = math.exp %146 : vector<8x128xf32>
    %cst_44 = arith.constant 1.000000e+00 : f32
    %148 = vector.broadcast %cst_44 : f32 to vector<8x128xf32>
    %149 = arith.addf %148, %147 : vector<8x128xf32>
    %150 = arith.divf %148, %149 : vector<8x128xf32>
    %151 = arith.mulf %142, %107 : vector<8x128xf32>
    %152 = arith.mulf %136, %144 : vector<8x128xf32>
    %153 = arith.addf %151, %152 : vector<8x128xf32>
    %154 = math.tanh %153 : vector<8x128xf32>
    %155 = arith.mulf %150, %154 : vector<8x128xf32>
    %156 = vector.broadcast %125 : vector<8x1xf32> to vector<8x128xf32>
    %157 = arith.mulf %156, %153 : vector<8x128xf32>
    %cst_45 = arith.constant 1.000000e+00 : f32
    %158 = vector.broadcast %cst_45 : f32 to vector<8x1xf32>
    %159 = arith.subf %158, %125 : vector<8x1xf32>
    %160 = vector.broadcast %159 : vector<8x1xf32> to vector<8x128xf32>
    %161 = arith.mulf %160, %107 : vector<8x128xf32>
    %162 = arith.addf %157, %161 : vector<8x128xf32>
    %163 = vector.broadcast %125 : vector<8x1xf32> to vector<8x128xf32>
    %164 = arith.mulf %163, %155 : vector<8x128xf32>
    %cst_46 = arith.constant 1.000000e+00 : f32
    %165 = vector.broadcast %cst_46 : f32 to vector<8x1xf32>
    %166 = arith.subf %165, %125 : vector<8x1xf32>
    %167 = vector.broadcast %166 : vector<8x1xf32> to vector<8x128xf32>
    %168 = arith.mulf %167, %114 : vector<8x128xf32>
    %169 = arith.addf %164, %168 : vector<8x128xf32>
    %170 = arith.truncf %169 : vector<8x128xf32> to vector<8x128xbf16>
    %171 = arith.index_cast %c2_i32 : i32 to index
    %c0_47 = arith.constant 0 : index
    %c0_48 = arith.constant 0 : index
    %172 = vector.load %arg7[%171, %c0_47, %c0_48] : memref<8x8x128xbf16, #tpu.memory_space<vmem>>, vector<1x8x128xbf16>
    %173 = vector.shape_cast %172 : vector<1x8x128xbf16> to vector<8x128xbf16>
    %174 = vector.shape_cast %170 : vector<8x128xbf16> to vector<1x8x128xbf16>
    tpu.vector_store %arg7[%171, %c0_47, %c0_48], %174 {strides = array<i32>} : memref<8x8x128xbf16, #tpu.memory_space<vmem>>, vector<1x8x128xbf16>,
    %c3_i32 = arith.constant 3 : i32
    %175 = arith.index_cast %c3_i32 : i32 to index
    %c0_49 = arith.constant 0 : index
    %c0_50 = arith.constant 0 : index
    %176 = vector.load %arg2[%175, %c0_49, %c0_50] : memref<8x8x32xbf16, #tpu.memory_space<vmem>>, vector<1x8x32xbf16>
    %177 = vector.shape_cast %176 : vector<1x8x32xbf16> to vector<8x32xbf16>
    %178 = arith.index_cast %c3_i32 : i32 to index
    %c0_51 = arith.constant 0 : index
    %c0_52 = arith.constant 0 : index
    %179 = vector.load %arg3[%178, %c0_51, %c0_52] : memref<8x8x1xf32, #tpu.memory_space<vmem>>, vector<1x8x1xf32>
    %180 = vector.shape_cast %179 : vector<1x8x1xf32> to vector<8x1xf32>
    %cst_53 = arith.constant dense<0.000000e+00> : vector<8x512xf32>
    %181 = tpu.matmul %177, %3, %cst_53 {dimension_numbers = #tpu.dot_dimension_numbers<[1], [0], [0], [1], [0, 0, 1, 1], [], []>} : vector<8x32xbf16>, vector<32x512xbf16>, vector<8x512xf32> -> vector<8x512xf32>
    %182 = arith.truncf %169 : vector<8x128xf32> to vector<8x128xbf16>
    %cst_54 = arith.constant dense<0.000000e+00> : vector<8x512xf32>
    %183 = tpu.matmul %182, %4, %cst_54 {dimension_numbers = #tpu.dot_dimension_numbers<[1], [0], [0], [1], [0, 0, 1, 1], [], []>} : vector<8x128xbf16>, vector<128x512xbf16>, vector<8x512xf32> -> vector<8x512xf32>
    %184 = arith.addf %181, %183 : vector<8x512xf32>
    %185 = arith.addf %184, %7 : vector<8x512xf32>
    %186 = vector.extract_strided_slice %185 {offsets = [0, 0], sizes = [8, 128], strides = [1, 1]} : vector<8x512xf32> to vector<8x128xf32>
    %187 = arith.negf %186 : vector<8x128xf32>
    %188 = math.exp %187 : vector<8x128xf32>
    %cst_55 = arith.constant 1.000000e+00 : f32
    %189 = vector.broadcast %cst_55 : f32 to vector<8x128xf32>
    %190 = arith.addf %189, %188 : vector<8x128xf32>
    %191 = arith.divf %189, %190 : vector<8x128xf32>
    %192 = vector.extract_strided_slice %185 {offsets = [0, 128], sizes = [8, 128], strides = [1, 1]} : vector<8x512xf32> to vector<8x128xf32>
    %193 = arith.negf %192 : vector<8x128xf32>
    %194 = math.exp %193 : vector<8x128xf32>
    %cst_56 = arith.constant 1.000000e+00 : f32
    %195 = vector.broadcast %cst_56 : f32 to vector<8x128xf32>
    %196 = arith.addf %195, %194 : vector<8x128xf32>
    %197 = arith.divf %195, %196 : vector<8x128xf32>
    %198 = vector.extract_strided_slice %185 {offsets = [0, 256], sizes = [8, 128], strides = [1, 1]} : vector<8x512xf32> to vector<8x128xf32>
    %199 = math.tanh %198 : vector<8x128xf32>
    %200 = vector.extract_strided_slice %185 {offsets = [0, 384], sizes = [8, 128], strides = [1, 1]} : vector<8x512xf32> to vector<8x128xf32>
    %201 = arith.negf %200 : vector<8x128xf32>
    %202 = math.exp %201 : vector<8x128xf32>
    %cst_57 = arith.constant 1.000000e+00 : f32
    %203 = vector.broadcast %cst_57 : f32 to vector<8x128xf32>
    %204 = arith.addf %203, %202 : vector<8x128xf32>
    %205 = arith.divf %203, %204 : vector<8x128xf32>
    %206 = arith.mulf %197, %162 : vector<8x128xf32>
    %207 = arith.mulf %191, %199 : vector<8x128xf32>
    %208 = arith.addf %206, %207 : vector<8x128xf32>
    %209 = math.tanh %208 : vector<8x128xf32>
    %210 = arith.mulf %205, %209 : vector<8x128xf32>
    %211 = vector.broadcast %180 : vector<8x1xf32> to vector<8x128xf32>
    %212 = arith.mulf %211, %208 : vector<8x128xf32>
    %cst_58 = arith.constant 1.000000e+00 : f32
    %213 = vector.broadcast %cst_58 : f32 to vector<8x1xf32>
    %214 = arith.subf %213, %180 : vector<8x1xf32>
    %215 = vector.broadcast %214 : vector<8x1xf32> to vector<8x128xf32>
    %216 = arith.mulf %215, %162 : vector<8x128xf32>
    %217 = arith.addf %212, %216 : vector<8x128xf32>
    %218 = vector.broadcast %180 : vector<8x1xf32> to vector<8x128xf32>
    %219 = arith.mulf %218, %210 : vector<8x128xf32>
    %cst_59 = arith.constant 1.000000e+00 : f32
    %220 = vector.broadcast %cst_59 : f32 to vector<8x1xf32>
    %221 = arith.subf %220, %180 : vector<8x1xf32>
    %222 = vector.broadcast %221 : vector<8x1xf32> to vector<8x128xf32>
    %223 = arith.mulf %222, %169 : vector<8x128xf32>
    %224 = arith.addf %219, %223 : vector<8x128xf32>
    %225 = arith.truncf %224 : vector<8x128xf32> to vector<8x128xbf16>
    %226 = arith.index_cast %c3_i32 : i32 to index
    %c0_60 = arith.constant 0 : index
    %c0_61 = arith.constant 0 : index
    %227 = vector.load %arg7[%226, %c0_60, %c0_61] : memref<8x8x128xbf16, #tpu.memory_space<vmem>>, vector<1x8x128xbf16>
    %228 = vector.shape_cast %227 : vector<1x8x128xbf16> to vector<8x128xbf16>
    %229 = vector.shape_cast %225 : vector<8x128xbf16> to vector<1x8x128xbf16>
    tpu.vector_store %arg7[%226, %c0_60, %c0_61], %229 {strides = array<i32>} : memref<8x8x128xbf16, #tpu.memory_space<vmem>>, vector<1x8x128xbf16>,
    %c4_i32 = arith.constant 4 : i32
    %230 = arith.index_cast %c4_i32 : i32 to index
    %c0_62 = arith.constant 0 : index
    %c0_63 = arith.constant 0 : index
    %231 = vector.load %arg2[%230, %c0_62, %c0_63] : memref<8x8x32xbf16, #tpu.memory_space<vmem>>, vector<1x8x32xbf16>
    %232 = vector.shape_cast %231 : vector<1x8x32xbf16> to vector<8x32xbf16>
    %233 = arith.index_cast %c4_i32 : i32 to index
    %c0_64 = arith.constant 0 : index
    %c0_65 = arith.constant 0 : index
    %234 = vector.load %arg3[%233, %c0_64, %c0_65] : memref<8x8x1xf32, #tpu.memory_space<vmem>>, vector<1x8x1xf32>
    %235 = vector.shape_cast %234 : vector<1x8x1xf32> to vector<8x1xf32>
    %cst_66 = arith.constant dense<0.000000e+00> : vector<8x512xf32>
    %236 = tpu.matmul %232, %3, %cst_66 {dimension_numbers = #tpu.dot_dimension_numbers<[1], [0], [0], [1], [0, 0, 1, 1], [], []>} : vector<8x32xbf16>, vector<32x512xbf16>, vector<8x512xf32> -> vector<8x512xf32>
    %237 = arith.truncf %224 : vector<8x128xf32> to vector<8x128xbf16>
    %cst_67 = arith.constant dense<0.000000e+00> : vector<8x512xf32>
    %238 = tpu.matmul %237, %4, %cst_67 {dimension_numbers = #tpu.dot_dimension_numbers<[1], [0], [0], [1], [0, 0, 1, 1], [], []>} : vector<8x128xbf16>, vector<128x512xbf16>, vector<8x512xf32> -> vector<8x512xf32>
    %239 = arith.addf %236, %238 : vector<8x512xf32>
    %240 = arith.addf %239, %7 : vector<8x512xf32>
    %241 = vector.extract_strided_slice %240 {offsets = [0, 0], sizes = [8, 128], strides = [1, 1]} : vector<8x512xf32> to vector<8x128xf32>
    %242 = arith.negf %241 : vector<8x128xf32>
    %243 = math.exp %242 : vector<8x128xf32>
    %cst_68 = arith.constant 1.000000e+00 : f32
    %244 = vector.broadcast %cst_68 : f32 to vector<8x128xf32>
    %245 = arith.addf %244, %243 : vector<8x128xf32>
    %246 = arith.divf %244, %245 : vector<8x128xf32>
    %247 = vector.extract_strided_slice %240 {offsets = [0, 128], sizes = [8, 128], strides = [1, 1]} : vector<8x512xf32> to vector<8x128xf32>
    %248 = arith.negf %247 : vector<8x128xf32>
    %249 = math.exp %248 : vector<8x128xf32>
    %cst_69 = arith.constant 1.000000e+00 : f32
    %250 = vector.broadcast %cst_69 : f32 to vector<8x128xf32>
    %251 = arith.addf %250, %249 : vector<8x128xf32>
    %252 = arith.divf %250, %251 : vector<8x128xf32>
    %253 = vector.extract_strided_slice %240 {offsets = [0, 256], sizes = [8, 128], strides = [1, 1]} : vector<8x512xf32> to vector<8x128xf32>
    %254 = math.tanh %253 : vector<8x128xf32>
    %255 = vector.extract_strided_slice %240 {offsets = [0, 384], sizes = [8, 128], strides = [1, 1]} : vector<8x512xf32> to vector<8x128xf32>
    %256 = arith.negf %255 : vector<8x128xf32>
    %257 = math.exp %256 : vector<8x128xf32>
    %cst_70 = arith.constant 1.000000e+00 : f32
    %258 = vector.broadcast %cst_70 : f32 to vector<8x128xf32>
    %259 = arith.addf %258, %257 : vector<8x128xf32>
    %260 = arith.divf %258, %259 : vector<8x128xf32>
    %261 = arith.mulf %252, %217 : vector<8x128xf32>
    %262 = arith.mulf %246, %254 : vector<8x128xf32>
    %263 = arith.addf %261, %262 : vector<8x128xf32>
    %264 = math.tanh %263 : vector<8x128xf32>
    %265 = arith.mulf %260, %264 : vector<8x128xf32>
    %266 = vector.broadcast %235 : vector<8x1xf32> to vector<8x128xf32>
    %267 = arith.mulf %266, %263 : vector<8x128xf32>
    %cst_71 = arith.constant 1.000000e+00 : f32
    %268 = vector.broadcast %cst_71 : f32 to vector<8x1xf32>
    %269 = arith.subf %268, %235 : vector<8x1xf32>
    %270 = vector.broadcast %269 : vector<8x1xf32> to vector<8x128xf32>
    %271 = arith.mulf %270, %217 : vector<8x128xf32>
    %272 = arith.addf %267, %271 : vector<8x128xf32>
    %273 = vector.broadcast %235 : vector<8x1xf32> to vector<8x128xf32>
    %274 = arith.mulf %273, %265 : vector<8x128xf32>
    %cst_72 = arith.constant 1.000000e+00 : f32
    %275 = vector.broadcast %cst_72 : f32 to vector<8x1xf32>
    %276 = arith.subf %275, %235 : vector<8x1xf32>
    %277 = vector.broadcast %276 : vector<8x1xf32> to vector<8x128xf32>
    %278 = arith.mulf %277, %224 : vector<8x128xf32>
    %279 = arith.addf %274, %278 : vector<8x128xf32>
    %280 = arith.truncf %279 : vector<8x128xf32> to vector<8x128xbf16>
    %281 = arith.index_cast %c4_i32 : i32 to index
    %c0_73 = arith.constant 0 : index
    %c0_74 = arith.constant 0 : index
    %282 = vector.load %arg7[%281, %c0_73, %c0_74] : memref<8x8x128xbf16, #tpu.memory_space<vmem>>, vector<1x8x128xbf16>
    %283 = vector.shape_cast %282 : vector<1x8x128xbf16> to vector<8x128xbf16>
    %284 = vector.shape_cast %280 : vector<8x128xbf16> to vector<1x8x128xbf16>
    tpu.vector_store %arg7[%281, %c0_73, %c0_74], %284 {strides = array<i32>} : memref<8x8x128xbf16, #tpu.memory_space<vmem>>, vector<1x8x128xbf16>,
    %c5_i32 = arith.constant 5 : i32
    %285 = arith.index_cast %c5_i32 : i32 to index
    %c0_75 = arith.constant 0 : index
    %c0_76 = arith.constant 0 : index
    %286 = vector.load %arg2[%285, %c0_75, %c0_76] : memref<8x8x32xbf16, #tpu.memory_space<vmem>>, vector<1x8x32xbf16>
    %287 = vector.shape_cast %286 : vector<1x8x32xbf16> to vector<8x32xbf16>
    %288 = arith.index_cast %c5_i32 : i32 to index
    %c0_77 = arith.constant 0 : index
    %c0_78 = arith.constant 0 : index
    %289 = vector.load %arg3[%288, %c0_77, %c0_78] : memref<8x8x1xf32, #tpu.memory_space<vmem>>, vector<1x8x1xf32>
    %290 = vector.shape_cast %289 : vector<1x8x1xf32> to vector<8x1xf32>
    %cst_79 = arith.constant dense<0.000000e+00> : vector<8x512xf32>
    %291 = tpu.matmul %287, %3, %cst_79 {dimension_numbers = #tpu.dot_dimension_numbers<[1], [0], [0], [1], [0, 0, 1, 1], [], []>} : vector<8x32xbf16>, vector<32x512xbf16>, vector<8x512xf32> -> vector<8x512xf32>
    %292 = arith.truncf %279 : vector<8x128xf32> to vector<8x128xbf16>
    %cst_80 = arith.constant dense<0.000000e+00> : vector<8x512xf32>
    %293 = tpu.matmul %292, %4, %cst_80 {dimension_numbers = #tpu.dot_dimension_numbers<[1], [0], [0], [1], [0, 0, 1, 1], [], []>} : vector<8x128xbf16>, vector<128x512xbf16>, vector<8x512xf32> -> vector<8x512xf32>
    %294 = arith.addf %291, %293 : vector<8x512xf32>
    %295 = arith.addf %294, %7 : vector<8x512xf32>
    %296 = vector.extract_strided_slice %295 {offsets = [0, 0], sizes = [8, 128], strides = [1, 1]} : vector<8x512xf32> to vector<8x128xf32>
    %297 = arith.negf %296 : vector<8x128xf32>
    %298 = math.exp %297 : vector<8x128xf32>
    %cst_81 = arith.constant 1.000000e+00 : f32
    %299 = vector.broadcast %cst_81 : f32 to vector<8x128xf32>
    %300 = arith.addf %299, %298 : vector<8x128xf32>
    %301 = arith.divf %299, %300 : vector<8x128xf32>
    %302 = vector.extract_strided_slice %295 {offsets = [0, 128], sizes = [8, 128], strides = [1, 1]} : vector<8x512xf32> to vector<8x128xf32>
    %303 = arith.negf %302 : vector<8x128xf32>
    %304 = math.exp %303 : vector<8x128xf32>
    %cst_82 = arith.constant 1.000000e+00 : f32
    %305 = vector.broadcast %cst_82 : f32 to vector<8x128xf32>
    %306 = arith.addf %305, %304 : vector<8x128xf32>
    %307 = arith.divf %305, %306 : vector<8x128xf32>
    %308 = vector.extract_strided_slice %295 {offsets = [0, 256], sizes = [8, 128], strides = [1, 1]} : vector<8x512xf32> to vector<8x128xf32>
    %309 = math.tanh %308 : vector<8x128xf32>
    %310 = vector.extract_strided_slice %295 {offsets = [0, 384], sizes = [8, 128], strides = [1, 1]} : vector<8x512xf32> to vector<8x128xf32>
    %311 = arith.negf %310 : vector<8x128xf32>
    %312 = math.exp %311 : vector<8x128xf32>
    %cst_83 = arith.constant 1.000000e+00 : f32
    %313 = vector.broadcast %cst_83 : f32 to vector<8x128xf32>
    %314 = arith.addf %313, %312 : vector<8x128xf32>
    %315 = arith.divf %313, %314 : vector<8x128xf32>
    %316 = arith.mulf %307, %272 : vector<8x128xf32>
    %317 = arith.mulf %301, %309 : vector<8x128xf32>
    %318 = arith.addf %316, %317 : vector<8x128xf32>
    %319 = math.tanh %318 : vector<8x128xf32>
    %320 = arith.mulf %315, %319 : vector<8x128xf32>
    %321 = vector.broadcast %290 : vector<8x1xf32> to vector<8x128xf32>
    %322 = arith.mulf %321, %318 : vector<8x128xf32>
    %cst_84 = arith.constant 1.000000e+00 : f32
    %323 = vector.broadcast %cst_84 : f32 to vector<8x1xf32>
    %324 = arith.subf %323, %290 : vector<8x1xf32>
    %325 = vector.broadcast %324 : vector<8x1xf32> to vector<8x128xf32>
    %326 = arith.mulf %325, %272 : vector<8x128xf32>
    %327 = arith.addf %322, %326 : vector<8x128xf32>
    %328 = vector.broadcast %290 : vector<8x1xf32> to vector<8x128xf32>
    %329 = arith.mulf %328, %320 : vector<8x128xf32>
    %cst_85 = arith.constant 1.000000e+00 : f32
    %330 = vector.broadcast %cst_85 : f32 to vector<8x1xf32>
    %331 = arith.subf %330, %290 : vector<8x1xf32>
    %332 = vector.broadcast %331 : vector<8x1xf32> to vector<8x128xf32>
    %333 = arith.mulf %332, %279 : vector<8x128xf32>
    %334 = arith.addf %329, %333 : vector<8x128xf32>
    %335 = arith.truncf %334 : vector<8x128xf32> to vector<8x128xbf16>
    %336 = arith.index_cast %c5_i32 : i32 to index
    %c0_86 = arith.constant 0 : index
    %c0_87 = arith.constant 0 : index
    %337 = vector.load %arg7[%336, %c0_86, %c0_87] : memref<8x8x128xbf16, #tpu.memory_space<vmem>>, vector<1x8x128xbf16>
    %338 = vector.shape_cast %337 : vector<1x8x128xbf16> to vector<8x128xbf16>
    %339 = vector.shape_cast %335 : vector<8x128xbf16> to vector<1x8x128xbf16>
    tpu.vector_store %arg7[%336, %c0_86, %c0_87], %339 {strides = array<i32>} : memref<8x8x128xbf16, #tpu.memory_space<vmem>>, vector<1x8x128xbf16>,
    %c6_i32 = arith.constant 6 : i32
    %340 = arith.index_cast %c6_i32 : i32 to index
    %c0_88 = arith.constant 0 : index
    %c0_89 = arith.constant 0 : index
    %341 = vector.load %arg2[%340, %c0_88, %c0_89] : memref<8x8x32xbf16, #tpu.memory_space<vmem>>, vector<1x8x32xbf16>
    %342 = vector.shape_cast %341 : vector<1x8x32xbf16> to vector<8x32xbf16>
    %343 = arith.index_cast %c6_i32 : i32 to index
    %c0_90 = arith.constant 0 : index
    %c0_91 = arith.constant 0 : index
    %344 = vector.load %arg3[%343, %c0_90, %c0_91] : memref<8x8x1xf32, #tpu.memory_space<vmem>>, vector<1x8x1xf32>
    %345 = vector.shape_cast %344 : vector<1x8x1xf32> to vector<8x1xf32>
    %cst_92 = arith.constant dense<0.000000e+00> : vector<8x512xf32>
    %346 = tpu.matmul %342, %3, %cst_92 {dimension_numbers = #tpu.dot_dimension_numbers<[1], [0], [0], [1], [0, 0, 1, 1], [], []>} : vector<8x32xbf16>, vector<32x512xbf16>, vector<8x512xf32> -> vector<8x512xf32>
    %347 = arith.truncf %334 : vector<8x128xf32> to vector<8x128xbf16>
    %cst_93 = arith.constant dense<0.000000e+00> : vector<8x512xf32>
    %348 = tpu.matmul %347, %4, %cst_93 {dimension_numbers = #tpu.dot_dimension_numbers<[1], [0], [0], [1], [0, 0, 1, 1], [], []>} : vector<8x128xbf16>, vector<128x512xbf16>, vector<8x512xf32> -> vector<8x512xf32>
    %349 = arith.addf %346, %348 : vector<8x512xf32>
    %350 = arith.addf %349, %7 : vector<8x512xf32>
    %351 = vector.extract_strided_slice %350 {offsets = [0, 0], sizes = [8, 128], strides = [1, 1]} : vector<8x512xf32> to vector<8x128xf32>
    %352 = arith.negf %351 : vector<8x128xf32>
    %353 = math.exp %352 : vector<8x128xf32>
    %cst_94 = arith.constant 1.000000e+00 : f32
    %354 = vector.broadcast %cst_94 : f32 to vector<8x128xf32>
    %355 = arith.addf %354, %353 : vector<8x128xf32>
    %356 = arith.divf %354, %355 : vector<8x128xf32>
    %357 = vector.extract_strided_slice %350 {offsets = [0, 128], sizes = [8, 128], strides = [1, 1]} : vector<8x512xf32> to vector<8x128xf32>
    %358 = arith.negf %357 : vector<8x128xf32>
    %359 = math.exp %358 : vector<8x128xf32>
    %cst_95 = arith.constant 1.000000e+00 : f32
    %360 = vector.broadcast %cst_95 : f32 to vector<8x128xf32>
    %361 = arith.addf %360, %359 : vector<8x128xf32>
    %362 = arith.divf %360, %361 : vector<8x128xf32>
    %363 = vector.extract_strided_slice %350 {offsets = [0, 256], sizes = [8, 128], strides = [1, 1]} : vector<8x512xf32> to vector<8x128xf32>
    %364 = math.tanh %363 : vector<8x128xf32>
    %365 = vector.extract_strided_slice %350 {offsets = [0, 384], sizes = [8, 128], strides = [1, 1]} : vector<8x512xf32> to vector<8x128xf32>
    %366 = arith.negf %365 : vector<8x128xf32>
    %367 = math.exp %366 : vector<8x128xf32>
    %cst_96 = arith.constant 1.000000e+00 : f32
    %368 = vector.broadcast %cst_96 : f32 to vector<8x128xf32>
    %369 = arith.addf %368, %367 : vector<8x128xf32>
    %370 = arith.divf %368, %369 : vector<8x128xf32>
    %371 = arith.mulf %362, %327 : vector<8x128xf32>
    %372 = arith.mulf %356, %364 : vector<8x128xf32>
    %373 = arith.addf %371, %372 : vector<8x128xf32>
    %374 = math.tanh %373 : vector<8x128xf32>
    %375 = arith.mulf %370, %374 : vector<8x128xf32>
    %376 = vector.broadcast %345 : vector<8x1xf32> to vector<8x128xf32>
    %377 = arith.mulf %376, %373 : vector<8x128xf32>
    %cst_97 = arith.constant 1.000000e+00 : f32
    %378 = vector.broadcast %cst_97 : f32 to vector<8x1xf32>
    %379 = arith.subf %378, %345 : vector<8x1xf32>
    %380 = vector.broadcast %379 : vector<8x1xf32> to vector<8x128xf32>
    %381 = arith.mulf %380, %327 : vector<8x128xf32>
    %382 = arith.addf %377, %381 : vector<8x128xf32>
    %383 = vector.broadcast %345 : vector<8x1xf32> to vector<8x128xf32>
    %384 = arith.mulf %383, %375 : vector<8x128xf32>
    %cst_98 = arith.constant 1.000000e+00 : f32
    %385 = vector.broadcast %cst_98 : f32 to vector<8x1xf32>
    %386 = arith.subf %385, %345 : vector<8x1xf32>
    %387 = vector.broadcast %386 : vector<8x1xf32> to vector<8x128xf32>
    %388 = arith.mulf %387, %334 : vector<8x128xf32>
    %389 = arith.addf %384, %388 : vector<8x128xf32>
    %390 = arith.truncf %389 : vector<8x128xf32> to vector<8x128xbf16>
    %391 = arith.index_cast %c6_i32 : i32 to index
    %c0_99 = arith.constant 0 : index
    %c0_100 = arith.constant 0 : index
    %392 = vector.load %arg7[%391, %c0_99, %c0_100] : memref<8x8x128xbf16, #tpu.memory_space<vmem>>, vector<1x8x128xbf16>
    %393 = vector.shape_cast %392 : vector<1x8x128xbf16> to vector<8x128xbf16>
    %394 = vector.shape_cast %390 : vector<8x128xbf16> to vector<1x8x128xbf16>
    tpu.vector_store %arg7[%391, %c0_99, %c0_100], %394 {strides = array<i32>} : memref<8x8x128xbf16, #tpu.memory_space<vmem>>, vector<1x8x128xbf16>,
    %c7_i32 = arith.constant 7 : i32
    %395 = arith.index_cast %c7_i32 : i32 to index
    %c0_101 = arith.constant 0 : index
    %c0_102 = arith.constant 0 : index
    %396 = vector.load %arg2[%395, %c0_101, %c0_102] : memref<8x8x32xbf16, #tpu.memory_space<vmem>>, vector<1x8x32xbf16>
    %397 = vector.shape_cast %396 : vector<1x8x32xbf16> to vector<8x32xbf16>
    %398 = arith.index_cast %c7_i32 : i32 to index
    %c0_103 = arith.constant 0 : index
    %c0_104 = arith.constant 0 : index
    %399 = vector.load %arg3[%398, %c0_103, %c0_104] : memref<8x8x1xf32, #tpu.memory_space<vmem>>, vector<1x8x1xf32>
    %400 = vector.shape_cast %399 : vector<1x8x1xf32> to vector<8x1xf32>
    %cst_105 = arith.constant dense<0.000000e+00> : vector<8x512xf32>
    %401 = tpu.matmul %397, %3, %cst_105 {dimension_numbers = #tpu.dot_dimension_numbers<[1], [0], [0], [1], [0, 0, 1, 1], [], []>} : vector<8x32xbf16>, vector<32x512xbf16>, vector<8x512xf32> -> vector<8x512xf32>
    %402 = arith.truncf %389 : vector<8x128xf32> to vector<8x128xbf16>
    %cst_106 = arith.constant dense<0.000000e+00> : vector<8x512xf32>
    %403 = tpu.matmul %402, %4, %cst_106 {dimension_numbers = #tpu.dot_dimension_numbers<[1], [0], [0], [1], [0, 0, 1, 1], [], []>} : vector<8x128xbf16>, vector<128x512xbf16>, vector<8x512xf32> -> vector<8x512xf32>
    %404 = arith.addf %401, %403 : vector<8x512xf32>
    %405 = arith.addf %404, %7 : vector<8x512xf32>
    %406 = vector.extract_strided_slice %405 {offsets = [0, 0], sizes = [8, 128], strides = [1, 1]} : vector<8x512xf32> to vector<8x128xf32>
    %407 = arith.negf %406 : vector<8x128xf32>
    %408 = math.exp %407 : vector<8x128xf32>
    %cst_107 = arith.constant 1.000000e+00 : f32
    %409 = vector.broadcast %cst_107 : f32 to vector<8x128xf32>
    %410 = arith.addf %409, %408 : vector<8x128xf32>
    %411 = arith.divf %409, %410 : vector<8x128xf32>
    %412 = vector.extract_strided_slice %405 {offsets = [0, 128], sizes = [8, 128], strides = [1, 1]} : vector<8x512xf32> to vector<8x128xf32>
    %413 = arith.negf %412 : vector<8x128xf32>
    %414 = math.exp %413 : vector<8x128xf32>
    %cst_108 = arith.constant 1.000000e+00 : f32
    %415 = vector.broadcast %cst_108 : f32 to vector<8x128xf32>
    %416 = arith.addf %415, %414 : vector<8x128xf32>
    %417 = arith.divf %415, %416 : vector<8x128xf32>
    %418 = vector.extract_strided_slice %405 {offsets = [0, 256], sizes = [8, 128], strides = [1, 1]} : vector<8x512xf32> to vector<8x128xf32>
    %419 = math.tanh %418 : vector<8x128xf32>
    %420 = vector.extract_strided_slice %405 {offsets = [0, 384], sizes = [8, 128], strides = [1, 1]} : vector<8x512xf32> to vector<8x128xf32>
    %421 = arith.negf %420 : vector<8x128xf32>
    %422 = math.exp %421 : vector<8x128xf32>
    %cst_109 = arith.constant 1.000000e+00 : f32
    %423 = vector.broadcast %cst_109 : f32 to vector<8x128xf32>
    %424 = arith.addf %423, %422 : vector<8x128xf32>
    %425 = arith.divf %423, %424 : vector<8x128xf32>
    %426 = arith.mulf %417, %382 : vector<8x128xf32>
    %427 = arith.mulf %411, %419 : vector<8x128xf32>
    %428 = arith.addf %426, %427 : vector<8x128xf32>
    %429 = math.tanh %428 : vector<8x128xf32>
    %430 = arith.mulf %425, %429 : vector<8x128xf32>
    %431 = vector.broadcast %400 : vector<8x1xf32> to vector<8x128xf32>
    %432 = arith.mulf %431, %428 : vector<8x128xf32>
    %cst_110 = arith.constant 1.000000e+00 : f32
    %433 = vector.broadcast %cst_110 : f32 to vector<8x1xf32>
    %434 = arith.subf %433, %400 : vector<8x1xf32>
    %435 = vector.broadcast %434 : vector<8x1xf32> to vector<8x128xf32>
    %436 = arith.mulf %435, %382 : vector<8x128xf32>
    %437 = arith.addf %432, %436 : vector<8x128xf32>
    %438 = vector.broadcast %400 : vector<8x1xf32> to vector<8x128xf32>
    %439 = arith.mulf %438, %430 : vector<8x128xf32>
    %cst_111 = arith.constant 1.000000e+00 : f32
    %440 = vector.broadcast %cst_111 : f32 to vector<8x1xf32>
    %441 = arith.subf %440, %400 : vector<8x1xf32>
    %442 = vector.broadcast %441 : vector<8x1xf32> to vector<8x128xf32>
    %443 = arith.mulf %442, %389 : vector<8x128xf32>
    %444 = arith.addf %439, %443 : vector<8x128xf32>
    %445 = arith.truncf %444 : vector<8x128xf32> to vector<8x128xbf16>
    %446 = arith.index_cast %c7_i32 : i32 to index
    %c0_112 = arith.constant 0 : index
    %c0_113 = arith.constant 0 : index
    %447 = vector.load %arg7[%446, %c0_112, %c0_113] : memref<8x8x128xbf16, #tpu.memory_space<vmem>>, vector<1x8x128xbf16>
    %448 = vector.shape_cast %447 : vector<1x8x128xbf16> to vector<8x128xbf16>
    %449 = vector.shape_cast %445 : vector<8x128xbf16> to vector<1x8x128xbf16>
    tpu.vector_store %arg7[%446, %c0_112, %c0_113], %449 {strides = array<i32>} : memref<8x8x128xbf16, #tpu.memory_space<vmem>>, vector<1x8x128xbf16>,
    %c8_i32 = arith.constant 8 : i32
    %c0_114 = arith.constant 0 : index
    %c0_115 = arith.constant 0 : index
    %450 = vector.load %arg8[%c0_114, %c0_115] : memref<8x128xf32, #tpu.memory_space<vmem>>, vector<8x128xf32>
    tpu.vector_store %arg8[%c0_114, %c0_115], %444 {strides = array<i32>} : memref<8x128xf32, #tpu.memory_space<vmem>>, vector<8x128xf32>,
    %c0_116 = arith.constant 0 : index
    %c0_117 = arith.constant 0 : index
    %451 = vector.load %arg9[%c0_116, %c0_117] : memref<8x128xf32, #tpu.memory_space<vmem>>, vector<8x128xf32>
    tpu.vector_store %arg9[%c0_116, %c0_117], %437 {strides = array<i32>} : memref<8x128xf32, #tpu.memory_space<vmem>>, vector<8x128xf32>,
    return
  }
  func.func @transform_0(%arg0: i32, %arg1: i32) -> (i32, i32, i32) {
    %c0_i32 = arith.constant 0 : i32
    %c0_i32_0 = arith.constant 0 : i32
    return %arg1, %arg0, %c0_i32 : i32, i32, i32
  }
  func.func @transform_1(%arg0: i32, %arg1: i32) -> (i32, i32, i32) {
    %c0_i32 = arith.constant 0 : i32
    %c0_i32_0 = arith.constant 0 : i32
    return %arg1, %arg0, %c0_i32 : i32, i32, i32
  }
  func.func @transform_2(%arg0: i32, %arg1: i32) -> (i32, i32) {
    %c0_i32 = arith.constant 0 : i32
    %c0_i32_0 = arith.constant 0 : i32
    %c0_i32_1 = arith.constant 0 : i32
    return %c0_i32, %c0_i32_0 : i32, i32
  }
  func.func @transform_3(%arg0: i32, %arg1: i32) -> (i32, i32) {
    %c0_i32 = arith.constant 0 : i32
    %c0_i32_0 = arith.constant 0 : i32
    %c0_i32_1 = arith.constant 0 : i32
    return %c0_i32, %c0_i32_0 : i32, i32
  }
  func.func @transform_4(%arg0: i32, %arg1: i32) -> (i32, i32) {
    %c0_i32 = arith.constant 0 : i32
    %c0_i32_0 = arith.constant 0 : i32
    %c0_i32_1 = arith.constant 0 : i32
    return %c0_i32, %c0_i32_0 : i32, i32
  }
  func.func @transform_5(%arg0: i32, %arg1: i32) -> (i32, i32, i32) {
    %c0_i32 = arith.constant 0 : i32
    %c0_i32_0 = arith.constant 0 : i32
    return %arg1, %arg0, %c0_i32 : i32, i32, i32
  }
}

</mosaic_0001>

<llo_original>
// kernel: tpu_custom_call.1
$region0: #{tpu_custom_call.1}
  #allocation0 [shape = 'u32[]', space=smem, size = 0x4, offset = 0x4, fixed_abs, tag = 'smem constant byte address 0x4 - core index']
  #allocation1 [shape = 'u32[144,128]{1,0:T(1,128)}', space=vmem, size = 0x12000, scoped, tag = 'internal scratch']
  #allocation2 [shape = 'f32[8,128]{1,0:T(8,128)}', space=vmem, size = 0x1000, scoped, tag = 'scratch operand']
  #allocation3 [shape = 'f32[8,128]{1,0:T(8,128)}', space=vmem, size = 0x1000, scoped, tag = 'scratch operand']
  %s0 = inlined_call_operand.hbm [shape: bf16[8,8,32], index: 0, kind: input, shape index: {}]
  %s1 = inlined_call_operand.vmem [shape: f32[8,8,1], index: 1, kind: input, shape index: {}]
  %s2 = inlined_call_operand.vmem [shape: bf16[32,512], index: 2, kind: input, shape index: {}]
  %s3 = inlined_call_operand.hbm [shape: bf16[128,512], index: 3, kind: input, shape index: {}]
  %s4 = inlined_call_operand.vmem [shape: f32[1,512], index: 4, kind: input, shape index: {}]
  %s5 = inlined_call_operand.hbm [shape: bf16[8,8,128], index: 5, kind: output, shape index: {}]
  %s6 = sld [smem:[#allocation0]]
  $region42: #{tpu_custom_call.1} parent=0
    _
  %s8 = ssub.s32 1, %s6
  %s9 = scalar_select 0, %s8, %s6
  $region1: #{tpu_custom_call.1} parent=0
    #allocation4 [shape = 'u8[16384]{0}', space=vmem, size = 0x4000, scoped, tag = 'input window, operand 0, single buffered']
    #allocation5 [shape = 's32[1]{0}', space=sflag, size = 0x4, scoped, tag = 'scoped memory for tpu_custom_call.1']
    #allocation6 [shape = 's32[1]{0}', space=sflag, size = 0x4, scoped, tag = 'scoped memory for tpu_custom_call.1']
    #allocation7 [shape = 'u8[131072]{0}', space=vmem, size = 0x20000, scoped, tag = 'input window, operand 3, single buffered']
    #allocation8 [shape = 's32[1]{0}', space=sflag, size = 0x4, scoped, tag = 'scoped memory for tpu_custom_call.1']
    #allocation9 [shape = 'u8[16384]{0}', space=vmem, size = 0x4000, scoped, tag = 'output window, operand 0, single buffered']
    %10 = vsyncpa [#allocation5], 0
    %11 = vsyncpa [#allocation8], 0
    %12 = vsyncpa [#allocation6], 0
    // Predicated region
    $region2: #{tpu_custom_call.1} parent=1 // pred_check
      _
    $region3: #{tpu_custom_call.1} parent=1 // pred_check_branch
      %14 = sbr.rel (0) target = $region5
    $region4: #{tpu_custom_call.1} parent=1 // pred_region
      %s16 = ssub.s32 512, 512
      %17 = vsyncadd [#allocation5], %s16
      %s18 = sshll.u32 [#allocation4], 4
      %s19 = int_to_ptr.vmem [resolvable:$true] %s18
      %24 = dma.hbm_to_vmem [thread:$0]  %s0, 512, %s19, [#allocation5], 64, 64, 4
    $region5: #{tpu_custom_call.1} parent=1 // pred_fallthru
      _
    // Predicated region
    $region6: #{tpu_custom_call.1} parent=1 // pred_check
      _
    $region7: #{tpu_custom_call.1} parent=1 // pred_check_branch
      %26 = sbr.rel (0) target = $region9
    $region8: #{tpu_custom_call.1} parent=1 // pred_region
      _
    $region9: #{tpu_custom_call.1} parent=1 // pred_fallthru
      _
    // Predicated region
    $region10: #{tpu_custom_call.1} parent=1 // pred_check
      _
    $region11: #{tpu_custom_call.1} parent=1 // pred_check_branch
      %28 = sbr.rel (0) target = $region13
    $region12: #{tpu_custom_call.1} parent=1 // pred_region
      _
    $region13: #{tpu_custom_call.1} parent=1 // pred_fallthru
      _
    // Predicated region
    $region14: #{tpu_custom_call.1} parent=1 // pred_check
      _
    $region15: #{tpu_custom_call.1} parent=1 // pred_check_branch
      %30 = sbr.rel (0) target = $region17
    $region16: #{tpu_custom_call.1} parent=1 // pred_region
      %s32 = ssub.s32 4096, 4096
      %33 = vsyncadd [#allocation8], %s32
      %s34 = sshll.u32 [#allocation7], 4
      %s35 = int_to_ptr.vmem [resolvable:$true] %s34
      %40 = dma.hbm_to_vmem [thread:$0]  %s3, 4096, %s35, [#allocation8], 256, 256, 16
    $region17: #{tpu_custom_call.1} parent=1 // pred_fallthru
      _
    // Predicated region
    $region18: #{tpu_custom_call.1} parent=1 // pred_check
      _
    $region19: #{tpu_custom_call.1} parent=1 // pred_check_branch
      %42 = sbr.rel (0) target = $region21
    $region20: #{tpu_custom_call.1} parent=1 // pred_region
      _
    $region21: #{tpu_custom_call.1} parent=1 // pred_fallthru
      _
    // Predicated region
    $region22: #{tpu_custom_call.1} parent=1 // pred_check
      _
    $region23: #{tpu_custom_call.1} parent=1 // pred_check_branch
      %44 = sbr.rel (0) target = $region25
    $region24: #{tpu_custom_call.1} parent=1 // pred_region
      %45 = dma.done [#allocation5], 512
    $region25: #{tpu_custom_call.1} parent=1 // pred_fallthru
      _
    // Predicated region
    $region26: #{tpu_custom_call.1} parent=1 // pred_check
      _
    $region27: #{tpu_custom_call.1} parent=1 // pred_check_branch
      %47 = sbr.rel (0) target = $region29
    $region28: #{tpu_custom_call.1} parent=1 // pred_region
      %48 = dma.done [#allocation8], 4096
    $region29: #{tpu_custom_call.1} parent=1 // pred_fallthru
      _
    %p50 = scmp.eq.s32.totalorder 0, 0
    // Predicated region
    $region30: #{tpu_custom_call.1} parent=1 // pred_check
      %p51 = pneg %p50
    $region31: #{tpu_custom_call.1} parent=1 // pred_check_branch
      %53 = sbr.rel (%p51) target = $region33
    $region32: #{tpu_custom_call.1} parent=1 // pred_region
      %54 = vst [vmem:[#allocation2] sm:$0xff] 0.0
      %55 = vst [vmem:[#allocation3] sm:$0xff] 0.0
    $region33: #{tpu_custom_call.1} parent=1 // pred_fallthru
      _
    %v56 = vld [vmem:[%s2] sm:$0xff]
    %v57 = vld [vmem:[%s2 + $0x8] sm:$0xff]
    %v58 = vld [vmem:[%s2 + $0x10] sm:$0xff]
    %v59 = vld [vmem:[%s2 + $0x18] sm:$0xff]
    %v60 = vld [vmem:[%s2 + $0x20] sm:$0xff]
    %v61 = vld [vmem:[%s2 + $0x28] sm:$0xff]
    %v62 = vld [vmem:[%s2 + $0x30] sm:$0xff]
    %v63 = vld [vmem:[%s2 + $0x38] sm:$0xff]
    %v64 = vld [vmem:[#allocation7] sm:$0xff]
    %v65 = vld [vmem:[#allocation7 + $0x8] sm:$0xff]
    %v66 = vld [vmem:[#allocation7 + $0x10] sm:$0xff]
    %v67 = vld [vmem:[#allocation7 + $0x18] sm:$0xff]
    %v68 = vld [vmem:[#allocation7 + $0x20] sm:$0xff]
    %v69 = vld [vmem:[#allocation7 + $0x28] sm:$0xff]
    %v70 = vld [vmem:[#allocation7 + $0x30] sm:$0xff]
    %v71 = vld [vmem:[#allocation7 + $0x38] sm:$0xff]
    %v72 = vld [vmem:[#allocation7 + $0x40] sm:$0xff]
    %v73 = vld [vmem:[#allocation7 + $0x48] sm:$0xff]
    %v74 = vld [vmem:[#allocation7 + $0x50] sm:$0xff]
    %v75 = vld [vmem:[#allocation7 + $0x58] sm:$0xff]
    %v76 = vld [vmem:[#allocation7 + $0x60] sm:$0xff]
    %v77 = vld [vmem:[#allocation7 + $0x68] sm:$0xff]
    %v78 = vld [vmem:[#allocation7 + $0x70] sm:$0xff]
    %v79 = vld [vmem:[#allocation7 + $0x78] sm:$0xff]
    %v80 = vld [vmem:[#allocation7 + $0x80] sm:$0xff]
    %v81 = vld [vmem:[#allocation7 + $0x88] sm:$0xff]
    %v82 = vld [vmem:[#allocation7 + $0x90] sm:$0xff]
    %v83 = vld [vmem:[#allocation7 + $0x98] sm:$0xff]
    %v84 = vld [vmem:[#allocation7 + $0xa0] sm:$0xff]
    %v85 = vld [vmem:[#allocation7 + $0xa8] sm:$0xff]
    %v86 = vld [vmem:[#allocation7 + $0xb0] sm:$0xff]
    %v87 = vld [vmem:[#allocation7 + $0xb8] sm:$0xff]
    %v88 = vld [vmem:[#allocation7 + $0xc0] sm:$0xff]
    %v89 = vld [vmem:[#allocation7 + $0xc8] sm:$0xff]
    %v90 = vld [vmem:[#allocation7 + $0xd0] sm:$0xff]
    %v91 = vld [vmem:[#allocation7 + $0xd8] sm:$0xff]
    %v92 = vld [vmem:[#allocation7 + $0xe0] sm:$0xff]
    %v93 = vld [vmem:[#allocation7 + $0xe8] sm:$0xff]
    %v94 = vld [vmem:[#allocation7 + $0xf0] sm:$0xff]
    %v95 = vld [vmem:[#allocation7 + $0xf8] sm:$0xff]
    %v96 = vld [vmem:[%s4] sm:$0xf]
    %v98 = vlaneseq
    %v99 = vshrl.u32 %v98, 7
    %v100 = vsub.s32 0, %v99
    %v101 = vrot.slane %v96, %v100
    %v102 = vlaneseq
    %v103 = vshrl.u32 %v102, 7
    %v104 = vsub.s32 1, %v103
    %v105 = vrot.slane %v96, %v104
    %v106 = vlaneseq
    %v107 = vshrl.u32 %v106, 7
    %v108 = vsub.s32 2, %v107
    %v109 = vrot.slane %v96, %v108
    %v110 = vlaneseq
    %v111 = vshrl.u32 %v110, 7
    %v112 = vsub.s32 3, %v111
    %v113 = vrot.slane %v96, %v112
    %v118 = vld [vmem:[#allocation2] sm:$0xff]
    %v119 = vld [vmem:[#allocation3] sm:$0xff]
    %v120 = vld [vmem:[#allocation4] sm:$0xf]
    %v121 = vld [vmem:[%s1] sm:$0xff]
    %v122 = vpack.c.bf16 %v118, %v118
    %v155 = vunpack.c.l.b16 %v64
    %v156 = vunpack.c.h.b16 %v64
    %v157 = vunpack.c.l.b16 %v65
    %v158 = vunpack.c.h.b16 %v65
    %v159 = vunpack.c.l.b16 %v66
    %v160 = vunpack.c.h.b16 %v66
    %v161 = vunpack.c.l.b16 %v67
    %v162 = vunpack.c.h.b16 %v67
    %v163 = vunpack.c.l.b16 %v68
    %v164 = vunpack.c.h.b16 %v68
    %v165 = vunpack.c.l.b16 %v69
    %v166 = vunpack.c.h.b16 %v69
    %v167 = vunpack.c.l.b16 %v70
    %v168 = vunpack.c.h.b16 %v70
    %v169 = vunpack.c.l.b16 %v71
    %v170 = vunpack.c.h.b16 %v71
    %v171 = vunpack.c.l.b16 %v72
    %v172 = vunpack.c.h.b16 %v72
    %v173 = vunpack.c.l.b16 %v73
    %v174 = vunpack.c.h.b16 %v73
    %v175 = vunpack.c.l.b16 %v74
    %v176 = vunpack.c.h.b16 %v74
    %v177 = vunpack.c.l.b16 %v75
    %v178 = vunpack.c.h.b16 %v75
    %v179 = vunpack.c.l.b16 %v76
    %v180 = vunpack.c.h.b16 %v76
    %v181 = vunpack.c.l.b16 %v77
    %v182 = vunpack.c.h.b16 %v77
    %v183 = vunpack.c.l.b16 %v78
    %v184 = vunpack.c.h.b16 %v78
    %v185 = vunpack.c.l.b16 %v79
    %v186 = vunpack.c.h.b16 %v79
    %v187 = vunpack.c.l.b16 %v80
    %v188 = vunpack.c.h.b16 %v80
    %v189 = vunpack.c.l.b16 %v81
    %v190 = vunpack.c.h.b16 %v81
    %v191 = vunpack.c.l.b16 %v82
    %v192 = vunpack.c.h.b16 %v82
    %v193 = vunpack.c.l.b16 %v83
    %v194 = vunpack.c.h.b16 %v83
    %v195 = vunpack.c.l.b16 %v84
    %v196 = vunpack.c.h.b16 %v84
    %v197 = vunpack.c.l.b16 %v85
    %v198 = vunpack.c.h.b16 %v85
    %v199 = vunpack.c.l.b16 %v86
    %v200 = vunpack.c.h.b16 %v86
    %v201 = vunpack.c.l.b16 %v87
    %v202 = vunpack.c.h.b16 %v87
    %v203 = vunpack.c.l.b16 %v88
    %v204 = vunpack.c.h.b16 %v88
    %v205 = vunpack.c.l.b16 %v89
    %v206 = vunpack.c.h.b16 %v89
    %v207 = vunpack.c.l.b16 %v90
    %v208 = vunpack.c.h.b16 %v90
    %v209 = vunpack.c.l.b16 %v91
    %v210 = vunpack.c.h.b16 %v91
    %v211 = vunpack.c.l.b16 %v92
    %v212 = vunpack.c.h.b16 %v92
    %v213 = vunpack.c.l.b16 %v93
    %v214 = vunpack.c.h.b16 %v93
    %v215 = vunpack.c.l.b16 %v94
    %v216 = vunpack.c.h.b16 %v94
    %v217 = vunpack.c.l.b16 %v95
    %v218 = vunpack.c.h.b16 %v95
    %v219 = vpack.c.b16 %v159, %v155
    %v220 = vpack.c.b16 %v160, %v156
    %v221 = vpack.c.b16 %v161, %v157
    %v222 = vpack.c.b16 %v162, %v158
    %v223 = vpack.c.b16 %v167, %v163
    %v224 = vpack.c.b16 %v168, %v164
    %v225 = vpack.c.b16 %v169, %v165
    %v226 = vpack.c.b16 %v170, %v166
    %v227 = vpack.c.b16 %v175, %v171
    %v228 = vpack.c.b16 %v176, %v172
    %v229 = vpack.c.b16 %v177, %v173
    %v230 = vpack.c.b16 %v178, %v174
    %v231 = vpack.c.b16 %v183, %v179
    %v232 = vpack.c.b16 %v184, %v180
    %v233 = vpack.c.b16 %v185, %v181
    %v234 = vpack.c.b16 %v186, %v182
    %v235 = vpack.c.b16 %v191, %v187
    %v236 = vpack.c.b16 %v192, %v188
    %v237 = vpack.c.b16 %v193, %v189
    %v238 = vpack.c.b16 %v194, %v190
    %v239 = vpack.c.b16 %v199, %v195
    %v240 = vpack.c.b16 %v200, %v196
    %v241 = vpack.c.b16 %v201, %v197
    %v242 = vpack.c.b16 %v202, %v198
    %v243 = vpack.c.b16 %v207, %v203
    %v244 = vpack.c.b16 %v208, %v204
    %v245 = vpack.c.b16 %v209, %v205
    %v246 = vpack.c.b16 %v210, %v206
    %v247 = vpack.c.b16 %v215, %v211
    %v248 = vpack.c.b16 %v216, %v212
    %v249 = vpack.c.b16 %v217, %v213
    %v250 = vpack.c.b16 %v218, %v214
    %283 = vmatprep.subr.bf16.mxu0 %v220
    %284 = vmatpush1.bf16.msra.mxu0 %v219
    %285 = vmatprep.subr.bf16.mxu0 %v224
    %286 = vmatpush1.bf16.msra.mxu0 %v223
    %287 = vmatprep.subr.bf16.mxu0 %v228
    %288 = vmatpush1.bf16.msra.mxu0 %v227
    %289 = vmatprep.subr.bf16.mxu0 %v232
    %290 = vmatpush1.bf16.msra.mxu0 %v231
    %291 = vmatprep.subr.bf16.mxu0 %v236
    %292 = vmatpush1.bf16.msra.mxu0 %v235
    %293 = vmatprep.subr.bf16.mxu0 %v240
    %294 = vmatpush1.bf16.msra.mxu0 %v239
    %295 = vmatprep.subr.bf16.mxu0 %v244
    %296 = vmatpush1.bf16.msra.mxu0 %v243
    %297 = vmatprep.subr.bf16.mxu0 %v248
    %298 = vmatpush1.bf16.msra.mxu0 %v247
    %299 = vmatprep.subr.bf16.mxu0 0
    %300 = vmatpush1.bf16.msra.mxu0 0
    %301 = vmatprep.subr.bf16.mxu0 0
    %302 = vmatpush1.bf16.msra.mxu0 0
    %303 = vmatprep.subr.bf16.mxu0 0
    %304 = vmatpush1.bf16.msra.mxu0 0
    %305 = vmatprep.subr.bf16.mxu0 0
    %306 = vmatpush1.bf16.msra.mxu0 0
    %307 = vmatprep.subr.bf16.mxu0 0
    %308 = vmatpush1.bf16.msra.mxu0 0
    %309 = vmatprep.subr.bf16.mxu0 0
    %310 = vmatpush1.bf16.msra.mxu0 0
    %311 = vmatprep.subr.bf16.mxu0 0
    %312 = vmatpush1.bf16.msra.mxu0 0
    %313 = vmatprep.subr.bf16.mxu0 0
    %314 = vmatpush1.bf16.msra.mxu0 0
    %315 = vmatprep.mubr.bf16.mxu0 0
    %316 = vmatmul.mubr.bf16.gmra.mrb[0].mxu0 %v122
    %v317 = vpop.f32.mrb[0].mxu0
    %v318 = vadd.f32 0.0, %v317
    %v319 = vpop.f32.mrb[0].mxu0
    %v320 = vadd.f32 0.0, %v319
    %v321 = vpop.f32.mrb[0].mxu0
    %v322 = vpop.f32.mrb[0].mxu0
    %323 = vdwg.mxu0
    %324 = vmatprep.subr.bf16.mxu0 %v222
    %325 = vmatpush1.bf16.msra.mxu0 %v221
    %326 = vmatprep.subr.bf16.mxu0 %v226
    %327 = vmatpush1.bf16.msra.mxu0 %v225
    %328 = vmatprep.subr.bf16.mxu0 %v230
    %329 = vmatpush1.bf16.msra.mxu0 %v229
    %330 = vmatprep.subr.bf16.mxu0 %v234
    %331 = vmatpush1.bf16.msra.mxu0 %v233
    %332 = vmatprep.subr.bf16.mxu0 %v238
    %333 = vmatpush1.bf16.msra.mxu0 %v237
    %334 = vmatprep.subr.bf16.mxu0 %v242
    %335 = vmatpush1.bf16.msra.mxu0 %v241
    %336 = vmatprep.subr.bf16.mxu0 %v246
    %337 = vmatpush1.bf16.msra.mxu0 %v245
    %338 = vmatprep.subr.bf16.mxu0 %v250
    %339 = vmatpush1.bf16.msra.mxu0 %v249
    %340 = vmatprep.subr.bf16.mxu0 0
    %341 = vmatpush1.bf16.msra.mxu0 0
    %342 = vmatprep.subr.bf16.mxu0 0
    %343 = vmatpush1.bf16.msra.mxu0 0
    %344 = vmatprep.subr.bf16.mxu0 0
    %345 = vmatpush1.bf16.msra.mxu0 0
    %346 = vmatprep.subr.bf16.mxu0 0
    %347 = vmatpush1.bf16.msra.mxu0 0
    %348 = vmatprep.subr.bf16.mxu0 0
    %349 = vmatpush1.bf16.msra.mxu0 0
    %350 = vmatprep.subr.bf16.mxu0 0
    %351 = vmatpush1.bf16.msra.mxu0 0
    %352 = vmatprep.subr.bf16.mxu0 0
    %353 = vmatpush1.bf16.msra.mxu0 0
    %354 = vmatprep.subr.bf16.mxu0 0
    %355 = vmatpush1.bf16.msra.mxu0 0
    %356 = vmatprep.mubr.bf16.mxu0 0
    %357 = vmatmul.mubr.bf16.gmra.mrb[0].mxu0 %v122
    %v358 = vpop.f32.mrb[0].mxu0
    %v359 = vadd.f32 0.0, %v358
    %v360 = vpop.f32.mrb[0].mxu0
    %v361 = vadd.f32 0.0, %v360
    %v362 = vpop.f32.mrb[0].mxu0
    %v363 = vpop.f32.mrb[0].mxu0
    %364 = vdwg.mxu0
    %v373 = vunpack.c.l.b16 %v56
    %v374 = vunpack.c.h.b16 %v56
    %v375 = vunpack.c.l.b16 %v57
    %v376 = vunpack.c.h.b16 %v57
    %v377 = vunpack.c.l.b16 %v58
    %v378 = vunpack.c.h.b16 %v58
    %v379 = vunpack.c.l.b16 %v59
    %v380 = vunpack.c.h.b16 %v59
    %v381 = vunpack.c.l.b16 %v60
    %v382 = vunpack.c.h.b16 %v60
    %v383 = vunpack.c.l.b16 %v61
    %v384 = vunpack.c.h.b16 %v61
    %v385 = vunpack.c.l.b16 %v62
    %v386 = vunpack.c.h.b16 %v62
    %v387 = vunpack.c.l.b16 %v63
    %v388 = vunpack.c.h.b16 %v63
    %v389 = vpack.c.b16 %v377, %v373
    %v390 = vpack.c.b16 %v378, %v374
    %v391 = vpack.c.b16 %v379, %v375
    %v392 = vpack.c.b16 %v380, %v376
    %v393 = vpack.c.b16 %v385, %v381
    %v394 = vpack.c.b16 %v386, %v382
    %v395 = vpack.c.b16 %v387, %v383
    %v396 = vpack.c.b16 %v388, %v384
    %vm405 = vcmask 261120
    %v407 = vsel %vm405, %v120, 0
    %409 = vmatprep.subr.bf16.mxu0 %v390
    %410 = vmatpush1.bf16.msra.mxu0 %v389
    %411 = vmatprep.subr.bf16.mxu0 %v394
    %412 = vmatpush1.bf16.msra.mxu0 %v393
    %413 = vmatprep.subr.bf16.mxu0 0
    %414 = vmatpush1.bf16.msra.mxu0 0
    %415 = vmatprep.subr.bf16.mxu0 0
    %416 = vmatpush1.bf16.msra.mxu0 0
    %417 = vmatprep.subr.bf16.mxu0 0
    %418 = vmatpush1.bf16.msra.mxu0 0
    %419 = vmatprep.subr.bf16.mxu0 0
    %420 = vmatpush1.bf16.msra.mxu0 0
    %421 = vmatprep.subr.bf16.mxu0 0
    %422 = vmatpush1.bf16.msra.mxu0 0
    %423 = vmatprep.subr.bf16.mxu0 0
    %424 = vmatpush1.bf16.msra.mxu0 0
    %425 = vmatprep.subr.bf16.mxu0 0
    %426 = vmatpush1.bf16.msra.mxu0 0
    %427 = vmatprep.subr.bf16.mxu0 0
    %428 = vmatpush1.bf16.msra.mxu0 0
    %429 = vmatprep.subr.bf16.mxu0 0
    %430 = vmatpush1.bf16.msra.mxu0 0
    %431 = vmatprep.subr.bf16.mxu0 0
    %432 = vmatpush1.bf16.msra.mxu0 0
    %433 = vmatprep.subr.bf16.mxu0 0
    %434 = vmatpush1.bf16.msra.mxu0 0
    %435 = vmatprep.subr.bf16.mxu0 0
    %436 = vmatpush1.bf16.msra.mxu0 0
    %437 = vmatprep.subr.bf16.mxu0 0
    %438 = vmatpush1.bf16.msra.mxu0 0
    %439 = vmatprep.subr.bf16.mxu0 0
    %440 = vmatpush1.bf16.msra.mxu0 0
    %441 = vmatprep.mubr.bf16.mxu0 0
    %442 = vmatmul.mubr.bf16.gmra.mrb[0].mxu0 %v407
    %v443 = vpop.f32.mrb[0].mxu0
    %v444 = vadd.f32 %v318, %v443
    %v445 = vpop.f32.mrb[0].mxu0
    %v446 = vadd.f32 %v320, %v445
    %v447 = vpop.f32.mrb[0].mxu0
    %v448 = vpop.f32.mrb[0].mxu0
    %449 = vdwg.mxu0
    %450 = vmatprep.subr.bf16.mxu0 %v392
    %451 = vmatpush1.bf16.msra.mxu0 %v391
    %452 = vmatprep.subr.bf16.mxu0 %v396
    %453 = vmatpush1.bf16.msra.mxu0 %v395
    %454 = vmatprep.subr.bf16.mxu0 0
    %455 = vmatpush1.bf16.msra.mxu0 0
    %456 = vmatprep.subr.bf16.mxu0 0
    %457 = vmatpush1.bf16.msra.mxu0 0
    %458 = vmatprep.subr.bf16.mxu0 0
    %459 = vmatpush1.bf16.msra.mxu0 0
    %460 = vmatprep.subr.bf16.mxu0 0
    %461 = vmatpush1.bf16.msra.mxu0 0
    %462 = vmatprep.subr.bf16.mxu0 0
    %463 = vmatpush1.bf16.msra.mxu0 0
    %464 = vmatprep.subr.bf16.mxu0 0
    %465 = vmatpush1.bf16.msra.mxu0 0
    %466 = vmatprep.subr.bf16.mxu0 0
    %467 = vmatpush1.bf16.msra.mxu0 0
    %468 = vmatprep.subr.bf16.mxu0 0
    %469 = vmatpush1.bf16.msra.mxu0 0
    %470 = vmatprep.subr.bf16.mxu0 0
    %471 = vmatpush1.bf16.msra.mxu0 0
    %472 = vmatprep.subr.bf16.mxu0 0
    %473 = vmatpush1.bf16.msra.mxu0 0
    %474 = vmatprep.subr.bf16.mxu0 0
    %475 = vmatpush1.bf16.msra.mxu0 0
    %476 = vmatprep.subr.bf16.mxu0 0
    %477 = vmatpush1.bf16.msra.mxu0 0
    %478 = vmatprep.subr.bf16.mxu0 0
    %479 = vmatpush1.bf16.msra.mxu0 0
    %480 = vmatprep.subr.bf16.mxu0 0
    %481 = vmatpush1.bf16.msra.mxu0 0
    %482 = vmatprep.mubr.bf16.mxu0 0
    %483 = vmatmul.mubr.bf16.gmra.mrb[0].mxu0 %v407
    %v484 = vpop.f32.mrb[0].mxu0
    %v485 = vadd.f32 %v359, %v484
    %v486 = vpop.f32.mrb[0].mxu0
    %v487 = vadd.f32 %v361, %v486
    %v488 = vpop.f32.mrb[0].mxu0
    %v489 = vpop.f32.mrb[0].mxu0
    %490 = vdwg.mxu0
    %v491 = vadd.f32 %v444, %v101
    %v492 = vadd.f32 %v446, %v105
    %v493 = vadd.f32 %v485, %v109
    %v494 = vadd.f32 %v487, %v113
    %v495 = vxor.u32 %v491, 2147483648
    %v496 = vmul.f32 %v495, 1.442695
    %v497 = vpow.pop %v496
    %v498 = vadd.f32 %v497, 1.0
    %v499 = vrcp.pop %v498
    %v500 = vmul.f32 1.0, %v499
    %v501 = vxor.u32 %v492, 2147483648
    %v502 = vmul.f32 %v501, 1.442695
    %v503 = vpow.pop %v502
    %v504 = vadd.f32 %v503, 1.0
    %v505 = vrcp.pop %v504
    %v506 = vmul.f32 1.0, %v505
    %v507 = vtanh.pop %v493
    %v508 = vxor.u32 %v494, 2147483648
    %v509 = vmul.f32 %v508, 1.442695
    %v510 = vpow.pop %v509
    %v511 = vadd.f32 %v510, 1.0
    %v512 = vrcp.pop %v511
    %v513 = vmul.f32 1.0, %v512
    %v514 = vmul.f32 %v506, %v119
    %v515 = vmul.f32 %v500, %v507
    %v516 = vadd.f32 %v514, %v515
    %v517 = vtanh.pop %v516
    %v518 = vmul.f32 %v513, %v517
    %520 = vset.pattern.permute.xlu0 0
    %521 = vperm.xlu0 %520, %v121
    %v522 = vpop.permute.xlu0 %521
    %v524 = vmul.f32 %v522, %v516
    %v525 = vsub.f32 1.0, %v121
    %527 = vset.pattern.permute.xlu0 0
    %528 = vperm.xlu0 %527, %v525
    %v529 = vpop.permute.xlu0 %528
    %v531 = vmul.f32 %v529, %v119
    %v532 = vadd.f32 %v524, %v531
    %v533 = vmul.f32 %v522, %v518
    %v534 = vmul.f32 %v529, %v118
    %v535 = vadd.f32 %v533, %v534
    %v536 = vpack.c.bf16 %v535, %v535
    %537 = vst [vmem:[#allocation9] sm:$0xf] %v536
    %s538 = scalar_lea.vmem [#allocation4], 4
    %v539 = vld [vmem:[%s538] sm:$0xf]
    %s540 = scalar_lea.vmem %s1, 8
    %v541 = vld [vmem:[%s540] sm:$0xff]
    %542 = vmatprep.subr.bf16.mxu0 %v220
    %543 = vmatpush1.bf16.msra.mxu0 %v219
    %544 = vmatprep.subr.bf16.mxu0 %v224
    %545 = vmatpush1.bf16.msra.mxu0 %v223
    %546 = vmatprep.subr.bf16.mxu0 %v228
    %547 = vmatpush1.bf16.msra.mxu0 %v227
    %548 = vmatprep.subr.bf16.mxu0 %v232
    %549 = vmatpush1.bf16.msra.mxu0 %v231
    %550 = vmatprep.subr.bf16.mxu0 %v236
    %551 = vmatpush1.bf16.msra.mxu0 %v235
    %552 = vmatprep.subr.bf16.mxu0 %v240
    %553 = vmatpush1.bf16.msra.mxu0 %v239
    %554 = vmatprep.subr.bf16.mxu0 %v244
    %555 = vmatpush1.bf16.msra.mxu0 %v243
    %556 = vmatprep.subr.bf16.mxu0 %v248
    %557 = vmatpush1.bf16.msra.mxu0 %v247
    %558 = vmatprep.subr.bf16.mxu0 0
    %559 = vmatpush1.bf16.msra.mxu0 0
    %560 = vmatprep.subr.bf16.mxu0 0
    %561 = vmatpush1.bf16.msra.mxu0 0
    %562 = vmatprep.subr.bf16.mxu0 0
    %563 = vmatpush1.bf16.msra.mxu0 0
    %564 = vmatprep.subr.bf16.mxu0 0
    %565 = vmatpush1.bf16.msra.mxu0 0
    %566 = vmatprep.subr.bf16.mxu0 0
    %567 = vmatpush1.bf16.msra.mxu0 0
    %568 = vmatprep.subr.bf16.mxu0 0
    %569 = vmatpush1.bf16.msra.mxu0 0
    %570 = vmatprep.subr.bf16.mxu0 0
    %571 = vmatpush1.bf16.msra.mxu0 0
    %572 = vmatprep.subr.bf16.mxu0 0
    %573 = vmatpush1.bf16.msra.mxu0 0
    %574 = vmatprep.mubr.bf16.mxu0 0
    %575 = vmatmul.mubr.bf16.gmra.mrb[0].mxu0 %v536
    %v576 = vpop.f32.mrb[0].mxu0
    %v577 = vadd.f32 0.0, %v576
    %v578 = vpop.f32.mrb[0].mxu0
    %v579 = vadd.f32 0.0, %v578
    %v580 = vpop.f32.mrb[0].mxu0
    %v581 = vpop.f32.mrb[0].mxu0
    %582 = vdwg.mxu0
    %583 = vmatprep.subr.bf16.mxu0 %v222
    %584 = vmatpush1.bf16.msra.mxu0 %v221
    %585 = vmatprep.subr.bf16.mxu0 %v226
    %586 = vmatpush1.bf16.msra.mxu0 %v225
    %587 = vmatprep.subr.bf16.mxu0 %v230
    %588 = vmatpush1.bf16.msra.mxu0 %v229
    %589 = vmatprep.subr.bf16.mxu0 %v234
    %590 = vmatpush1.bf16.msra.mxu0 %v233
    %591 = vmatprep.subr.bf16.mxu0 %v238
    %592 = vmatpush1.bf16.msra.mxu0 %v237
    %593 = vmatprep.subr.bf16.mxu0 %v242
    %594 = vmatpush1.bf16.msra.mxu0 %v241
    %595 = vmatprep.subr.bf16.mxu0 %v246
    %596 = vmatpush1.bf16.msra.mxu0 %v245
    %597 = vmatprep.subr.bf16.mxu0 %v250
    %598 = vmatpush1.bf16.msra.mxu0 %v249
    %599 = vmatprep.subr.bf16.mxu0 0
    %600 = vmatpush1.bf16.msra.mxu0 0
    %601 = vmatprep.subr.bf16.mxu0 0
    %602 = vmatpush1.bf16.msra.mxu0 0
    %603 = vmatprep.subr.bf16.mxu0 0
    %604 = vmatpush1.bf16.msra.mxu0 0
    %605 = vmatprep.subr.bf16.mxu0 0
    %606 = vmatpush1.bf16.msra.mxu0 0
    %607 = vmatprep.subr.bf16.mxu0 0
    %608 = vmatpush1.bf16.msra.mxu0 0
    %609 = vmatprep.subr.bf16.mxu0 0
    %610 = vmatpush1.bf16.msra.mxu0 0
    %611 = vmatprep.subr.bf16.mxu0 0
    %612 = vmatpush1.bf16.msra.mxu0 0
    %613 = vmatprep.subr.bf16.mxu0 0
    %614 = vmatpush1.bf16.msra.mxu0 0
    %615 = vmatprep.mubr.bf16.mxu0 0
    %616 = vmatmul.mubr.bf16.gmra.mrb[0].mxu0 %v536
    %v617 = vpop.f32.mrb[0].mxu0
    %v618 = vadd.f32 0.0, %v617
    %v619 = vpop.f32.mrb[0].mxu0
    %v620 = vadd.f32 0.0, %v619
    %v621 = vpop.f32.mrb[0].mxu0
    %v622 = vpop.f32.mrb[0].mxu0
    %623 = vdwg.mxu0
    %v625 = vsel %vm405, %v539, 0
    %627 = vmatprep.subr.bf16.mxu0 %v390
    %628 = vmatpush1.bf16.msra.mxu0 %v389
    %629 = vmatprep.subr.bf16.mxu0 %v394
    %630 = vmatpush1.bf16.msra.mxu0 %v393
    %631 = vmatprep.subr.bf16.mxu0 0
    %632 = vmatpush1.bf16.msra.mxu0 0
    %633 = vmatprep.subr.bf16.mxu0 0
    %634 = vmatpush1.bf16.msra.mxu0 0
    %635 = vmatprep.subr.bf16.mxu0 0
    %636 = vmatpush1.bf16.msra.mxu0 0
    %637 = vmatprep.subr.bf16.mxu0 0
    %638 = vmatpush1.bf16.msra.mxu0 0
    %639 = vmatprep.subr.bf16.mxu0 0
    %640 = vmatpush1.bf16.msra.mxu0 0
    %641 = vmatprep.subr.bf16.mxu0 0
    %642 = vmatpush1.bf16.msra.mxu0 0
    %643 = vmatprep.subr.bf16.mxu0 0
    %644 = vmatpush1.bf16.msra.mxu0 0
    %645 = vmatprep.subr.bf16.mxu0 0
    %646 = vmatpush1.bf16.msra.mxu0 0
    %647 = vmatprep.subr.bf16.mxu0 0
    %648 = vmatpush1.bf16.msra.mxu0 0
    %649 = vmatprep.subr.bf16.mxu0 0
    %650 = vmatpush1.bf16.msra.mxu0 0
    %651 = vmatprep.subr.bf16.mxu0 0
    %652 = vmatpush1.bf16.msra.mxu0 0
    %653 = vmatprep.subr.bf16.mxu0 0
    %654 = vmatpush1.bf16.msra.mxu0 0
    %655 = vmatprep.subr.bf16.mxu0 0
    %656 = vmatpush1.bf16.msra.mxu0 0
    %657 = vmatprep.subr.bf16.mxu0 0
    %658 = vmatpush1.bf16.msra.mxu0 0
    %659 = vmatprep.mubr.bf16.mxu0 0
    %660 = vmatmul.mubr.bf16.gmra.mrb[0].mxu0 %v625
    %v661 = vpop.f32.mrb[0].mxu0
    %v662 = vadd.f32 %v577, %v661
    %v663 = vpop.f32.mrb[0].mxu0
    %v664 = vadd.f32 %v579, %v663
    %v665 = vpop.f32.mrb[0].mxu0
    %v666 = vpop.f32.mrb[0].mxu0
    %667 = vdwg.mxu0
    %668 = vmatprep.subr.bf16.mxu0 %v392
    %669 = vmatpush1.bf16.msra.mxu0 %v391
    %670 = vmatprep.subr.bf16.mxu0 %v396
    %671 = vmatpush1.bf16.msra.mxu0 %v395
    %672 = vmatprep.subr.bf16.mxu0 0
    %673 = vmatpush1.bf16.msra.mxu0 0
    %674 = vmatprep.subr.bf16.mxu0 0
    %675 = vmatpush1.bf16.msra.mxu0 0
    %676 = vmatprep.subr.bf16.mxu0 0
    %677 = vmatpush1.bf16.msra.mxu0 0
    %678 = vmatprep.subr.bf16.mxu0 0
    %679 = vmatpush1.bf16.msra.mxu0 0
    %680 = vmatprep.subr.bf16.mxu0 0
    %681 = vmatpush1.bf16.msra.mxu0 0
    %682 = vmatprep.subr.bf16.mxu0 0
    %683 = vmatpush1.bf16.msra.mxu0 0
    %684 = vmatprep.subr.bf16.mxu0 0
    %685 = vmatpush1.bf16.msra.mxu0 0
    %686 = vmatprep.subr.bf16.mxu0 0
    %687 = vmatpush1.bf16.msra.mxu0 0
    %688 = vmatprep.subr.bf16.mxu0 0
    %689 = vmatpush1.bf16.msra.mxu0 0
    %690 = vmatprep.subr.bf16.mxu0 0
    %691 = vmatpush1.bf16.msra.mxu0 0
    %692 = vmatprep.subr.bf16.mxu0 0
    %693 = vmatpush1.bf16.msra.mxu0 0
    %694 = vmatprep.subr.bf16.mxu0 0
    %695 = vmatpush1.bf16.msra.mxu0 0
    %696 = vmatprep.subr.bf16.mxu0 0
    %697 = vmatpush1.bf16.msra.mxu0 0
    %698 = vmatprep.subr.bf16.mxu0 0
    %699 = vmatpush1.bf16.msra.mxu0 0
    %700 = vmatprep.mubr.bf16.mxu0 0
    %701 = vmatmul.mubr.bf16.gmra.mrb[0].mxu0 %v625
    %v702 = vpop.f32.mrb[0].mxu0
    %v703 = vadd.f32 %v618, %v702
    %v704 = vpop.f32.mrb[0].mxu0
    %v705 = vadd.f32 %v620, %v704
    %v706 = vpop.f32.mrb[0].mxu0
    %v707 = vpop.f32.mrb[0].mxu0
    %708 = vdwg.mxu0
    %v709 = vadd.f32 %v662, %v101
    %v710 = vadd.f32 %v664, %v105
    %v711 = vadd.f32 %v703, %v109
    %v712 = vadd.f32 %v705, %v113
    %v713 = vxor.u32 %v709, 2147483648
    %v714 = vmul.f32 %v713, 1.442695
    %v715 = vpow.pop %v714
    %v716 = vadd.f32 %v715, 1.0
    %v717 = vrcp.pop %v716
    %v718 = vmul.f32 1.0, %v717
    %v719 = vxor.u32 %v710, 2147483648
    %v720 = vmul.f32 %v719, 1.442695
    %v721 = vpow.pop %v720
    %v722 = vadd.f32 %v721, 1.0
    %v723 = vrcp.pop %v722
    %v724 = vmul.f32 1.0, %v723
    %v725 = vtanh.pop %v711
    %v726 = vxor.u32 %v712, 2147483648
    %v727 = vmul.f32 %v726, 1.442695
    %v728 = vpow.pop %v727
    %v729 = vadd.f32 %v728, 1.0
    %v730 = vrcp.pop %v729
    %v731 = vmul.f32 1.0, %v730
    %v732 = vmul.f32 %v724, %v532
    %v733 = vmul.f32 %v718, %v725
    %v734 = vadd.f32 %v732, %v733
    %v735 = vtanh.pop %v734
    %v736 = vmul.f32 %v731, %v735
    %738 = vset.pattern.permute.xlu0 0
    %739 = vperm.xlu0 %738, %v541
    %v740 = vpop.permute.xlu0 %739
    %v742 = vmul.f32 %v740, %v734
    %v743 = vsub.f32 1.0, %v541
    %745 = vset.pattern.permute.xlu0 0
    %746 = vperm.xlu0 %745, %v743
    %v747 = vpop.permute.xlu0 %746
    %v749 = vmul.f32 %v747, %v532
    %v750 = vadd.f32 %v742, %v749
    %v751 = vmul.f32 %v740, %v736
    %v752 = vmul.f32 %v747, %v535
    %v753 = vadd.f32 %v751, %v752
    %v754 = vpack.c.bf16 %v753, %v753
    %s755 = scalar_lea.vmem [#allocation9], 4
    %756 = vst [vmem:[%s755] sm:$0xf] %v754
    %s757 = scalar_lea.vmem [#allocation4], 8
    %v758 = vld [vmem:[%s757] sm:$0xf]
    %s759 = scalar_lea.vmem %s1, 16
    %v760 = vld [vmem:[%s759] sm:$0xff]
    %761 = vmatprep.subr.bf16.mxu0 %v220
    %762 = vmatpush1.bf16.msra.mxu0 %v219
    %763 = vmatprep.subr.bf16.mxu0 %v224
    %764 = vmatpush1.bf16.msra.mxu0 %v223
    %765 = vmatprep.subr.bf16.mxu0 %v228
    %766 = vmatpush1.bf16.msra.mxu0 %v227
    %767 = vmatprep.subr.bf16.mxu0 %v232
    %768 = vmatpush1.bf16.msra.mxu0 %v231
    %769 = vmatprep.subr.bf16.mxu0 %v236
    %770 = vmatpush1.bf16.msra.mxu0 %v235
    %771 = vmatprep.subr.bf16.mxu0 %v240
    %772 = vmatpush1.bf16.msra.mxu0 %v239
    %773 = vmatprep.subr.bf16.mxu0 %v244
    %774 = vmatpush1.bf16.msra.mxu0 %v243
    %775 = vmatprep.subr.bf16.mxu0 %v248
    %776 = vmatpush1.bf16.msra.mxu0 %v247
    %777 = vmatprep.subr.bf16.mxu0 0
    %778 = vmatpush1.bf16.msra.mxu0 0
    %779 = vmatprep.subr.bf16.mxu0 0
    %780 = vmatpush1.bf16.msra.mxu0 0
    %781 = vmatprep.subr.bf16.mxu0 0
    %782 = vmatpush1.bf16.msra.mxu0 0
    %783 = vmatprep.subr.bf16.mxu0 0
    %784 = vmatpush1.bf16.msra.mxu0 0
    %785 = vmatprep.subr.bf16.mxu0 0
    %786 = vmatpush1.bf16.msra.mxu0 0
    %787 = vmatprep.subr.bf16.mxu0 0
    %788 = vmatpush1.bf16.msra.mxu0 0
    %789 = vmatprep.subr.bf16.mxu0 0
    %790 = vmatpush1.bf16.msra.mxu0 0
    %791 = vmatprep.subr.bf16.mxu0 0
    %792 = vmatpush1.bf16.msra.mxu0 0
    %793 = vmatprep.mubr.bf16.mxu0 0
    %794 = vmatmul.mubr.bf16.gmra.mrb[0].mxu0 %v754
    %v795 = vpop.f32.mrb[0].mxu0
    %v796 = vadd.f32 0.0, %v795
    %v797 = vpop.f32.mrb[0].mxu0
    %v798 = vadd.f32 0.0, %v797
    %v799 = vpop.f32.mrb[0].mxu0
    %v800 = vpop.f32.mrb[0].mxu0
    %801 = vdwg.mxu0
    %802 = vmatprep.subr.bf16.mxu0 %v222
    %803 = vmatpush1.bf16.msra.mxu0 %v221
    %804 = vmatprep.subr.bf16.mxu0 %v226
    %805 = vmatpush1.bf16.msra.mxu0 %v225
    %806 = vmatprep.subr.bf16.mxu0 %v230
    %807 = vmatpush1.bf16.msra.mxu0 %v229
    %808 = vmatprep.subr.bf16.mxu0 %v234
    %809 = vmatpush1.bf16.msra.mxu0 %v233
    %810 = vmatprep.subr.bf16.mxu0 %v238
    %811 = vmatpush1.bf16.msra.mxu0 %v237
    %812 = vmatprep.subr.bf16.mxu0 %v242
    %813 = vmatpush1.bf16.msra.mxu0 %v241
    %814 = vmatprep.subr.bf16.mxu0 %v246
    %815 = vmatpush1.bf16.msra.mxu0 %v245
    %816 = vmatprep.subr.bf16.mxu0 %v250
    %817 = vmatpush1.bf16.msra.mxu0 %v249
    %818 = vmatprep.subr.bf16.mxu0 0
    %819 = vmatpush1.bf16.msra.mxu0 0
    %820 = vmatprep.subr.bf16.mxu0 0
    %821 = vmatpush1.bf16.msra.mxu0 0
    %822 = vmatprep.subr.bf16.mxu0 0
    %823 = vmatpush1.bf16.msra.mxu0 0
    %824 = vmatprep.subr.bf16.mxu0 0
    %825 = vmatpush1.bf16.msra.mxu0 0
    %826 = vmatprep.subr.bf16.mxu0 0
    %827 = vmatpush1.bf16.msra.mxu0 0
    %828 = vmatprep.subr.bf16.mxu0 0
    %829 = vmatpush1.bf16.msra.mxu0 0
    %830 = vmatprep.subr.bf16.mxu0 0
    %831 = vmatpush1.bf16.msra.mxu0 0
    %832 = vmatprep.subr.bf16.mxu0 0
    %833 = vmatpush1.bf16.msra.mxu0 0
    %834 = vmatprep.mubr.bf16.mxu0 0
    %835 = vmatmul.mubr.bf16.gmra.mrb[0].mxu0 %v754
    %v836 = vpop.f32.mrb[0].mxu0
    %v837 = vadd.f32 0.0, %v836
    %v838 = vpop.f32.mrb[0].mxu0
    %v839 = vadd.f32 0.0, %v838
    %v840 = vpop.f32.mrb[0].mxu0
    %v841 = vpop.f32.mrb[0].mxu0
    %842 = vdwg.mxu0
    %v844 = vsel %vm405, %v758, 0
    %846 = vmatprep.subr.bf16.mxu0 %v390
    %847 = vmatpush1.bf16.msra.mxu0 %v389
    %848 = vmatprep.subr.bf16.mxu0 %v394
    %849 = vmatpush1.bf16.msra.mxu0 %v393
    %850 = vmatprep.subr.bf16.mxu0 0
    %851 = vmatpush1.bf16.msra.mxu0 0
    %852 = vmatprep.subr.bf16.mxu0 0
    %853 = vmatpush1.bf16.msra.mxu0 0
    %854 = vmatprep.subr.bf16.mxu0 0
    %855 = vmatpush1.bf16.msra.mxu0 0
    %856 = vmatprep.subr.bf16.mxu0 0
    %857 = vmatpush1.bf16.msra.mxu0 0
    %858 = vmatprep.subr.bf16.mxu0 0
    %859 = vmatpush1.bf16.msra.mxu0 0
    %860 = vmatprep.subr.bf16.mxu0 0
    %861 = vmatpush1.bf16.msra.mxu0 0
    %862 = vmatprep.subr.bf16.mxu0 0
    %863 = vmatpush1.bf16.msra.mxu0 0
    %864 = vmatprep.subr.bf16.mxu0 0
    %865 = vmatpush1.bf16.msra.mxu0 0
    %866 = vmatprep.subr.bf16.mxu0 0
    %867 = vmatpush1.bf16.msra.mxu0 0
    %868 = vmatprep.subr.bf16.mxu0 0
    %869 = vmatpush1.bf16.msra.mxu0 0
    %870 = vmatprep.subr.bf16.mxu0 0
    %871 = vmatpush1.bf16.msra.mxu0 0
    %872 = vmatprep.subr.bf16.mxu0 0
    %873 = vmatpush1.bf16.msra.mxu0 0
    %874 = vmatprep.subr.bf16.mxu0 0
    %875 = vmatpush1.bf16.msra.mxu0 0
    %876 = vmatprep.subr.bf16.mxu0 0
    %877 = vmatpush1.bf16.msra.mxu0 0
    %878 = vmatprep.mubr.bf16.mxu0 0
    %879 = vmatmul.mubr.bf16.gmra.mrb[0].mxu0 %v844
    %v880 = vpop.f32.mrb[0].mxu0
    %v881 = vadd.f32 %v796, %v880
    %v882 = vpop.f32.mrb[0].mxu0
    %v883 = vadd.f32 %v798, %v882
    %v884 = vpop.f32.mrb[0].mxu0
    %v885 = vpop.f32.mrb[0].mxu0
    %886 = vdwg.mxu0
    %887 = vmatprep.subr.bf16.mxu0 %v392
    %888 = vmatpush1.bf16.msra.mxu0 %v391
    %889 = vmatprep.subr.bf16.mxu0 %v396
    %890 = vmatpush1.bf16.msra.mxu0 %v395
    %891 = vmatprep.subr.bf16.mxu0 0
    %892 = vmatpush1.bf16.msra.mxu0 0
    %893 = vmatprep.subr.bf16.mxu0 0
    %894 = vmatpush1.bf16.msra.mxu0 0
    %895 = vmatprep.subr.bf16.mxu0 0
    %896 = vmatpush1.bf16.msra.mxu0 0
    %897 = vmatprep.subr.bf16.mxu0 0
    %898 = vmatpush1.bf16.msra.mxu0 0
    %899 = vmatprep.subr.bf16.mxu0 0
    %900 = vmatpush1.bf16.msra.mxu0 0
    %901 = vmatprep.subr.bf16.mxu0 0
    %902 = vmatpush1.bf16.msra.mxu0 0
    %903 = vmatprep.subr.bf16.mxu0 0
    %904 = vmatpush1.bf16.msra.mxu0 0
    %905 = vmatprep.subr.bf16.mxu0 0
    %906 = vmatpush1.bf16.msra.mxu0 0
    %907 = vmatprep.subr.bf16.mxu0 0
    %908 = vmatpush1.bf16.msra.mxu0 0
    %909 = vmatprep.subr.bf16.mxu0 0
    %910 = vmatpush1.bf16.msra.mxu0 0
    %911 = vmatprep.subr.bf16.mxu0 0
    %912 = vmatpush1.bf16.msra.mxu0 0
    %913 = vmatprep.subr.bf16.mxu0 0
    %914 = vmatpush1.bf16.msra.mxu0 0
    %915 = vmatprep.subr.bf16.mxu0 0
    %916 = vmatpush1.bf16.msra.mxu0 0
    %917 = vmatprep.subr.bf16.mxu0 0
    %918 = vmatpush1.bf16.msra.mxu0 0
    %919 = vmatprep.mubr.bf16.mxu0 0
    %920 = vmatmul.mubr.bf16.gmra.mrb[0].mxu0 %v844
    %v921 = vpop.f32.mrb[0].mxu0
    %v922 = vadd.f32 %v837, %v921
    %v923 = vpop.f32.mrb[0].mxu0
    %v924 = vadd.f32 %v839, %v923
    %v925 = vpop.f32.mrb[0].mxu0
    %v926 = vpop.f32.mrb[0].mxu0
    %927 = vdwg.mxu0
    %v928 = vadd.f32 %v881, %v101
    %v929 = vadd.f32 %v883, %v105
    %v930 = vadd.f32 %v922, %v109
    %v931 = vadd.f32 %v924, %v113
    %v932 = vxor.u32 %v928, 2147483648
    %v933 = vmul.f32 %v932, 1.442695
    %v934 = vpow.pop %v933
    %v935 = vadd.f32 %v934, 1.0
    %v936 = vrcp.pop %v935
    %v937 = vmul.f32 1.0, %v936
    %v938 = vxor.u32 %v929, 2147483648
    %v939 = vmul.f32 %v938, 1.442695
    %v940 = vpow.pop %v939
    %v941 = vadd.f32 %v940, 1.0
    %v942 = vrcp.pop %v941
    %v943 = vmul.f32 1.0, %v942
    %v944 = vtanh.pop %v930
    %v945 = vxor.u32 %v931, 2147483648
    %v946 = vmul.f32 %v945, 1.442695
    %v947 = vpow.pop %v946
    %v948 = vadd.f32 %v947, 1.0
    %v949 = vrcp.pop %v948
    %v950 = vmul.f32 1.0, %v949
    %v951 = vmul.f32 %v943, %v750
    %v952 = vmul.f32 %v937, %v944
    %v953 = vadd.f32 %v951, %v952
    %v954 = vtanh.pop %v953
    %v955 = vmul.f32 %v950, %v954
    %957 = vset.pattern.permute.xlu0 0
    %958 = vperm.xlu0 %957, %v760
    %v959 = vpop.permute.xlu0 %958
    %v961 = vmul.f32 %v959, %v953
    %v962 = vsub.f32 1.0, %v760
    %964 = vset.pattern.permute.xlu0 0
    %965 = vperm.xlu0 %964, %v962
    %v966 = vpop.permute.xlu0 %965
    %v968 = vmul.f32 %v966, %v750
    %v969 = vadd.f32 %v961, %v968
    %v970 = vmul.f32 %v959, %v955
    %v971 = vmul.f32 %v966, %v753
    %v972 = vadd.f32 %v970, %v971
    %v973 = vpack.c.bf16 %v972, %v972
    %s974 = scalar_lea.vmem [#allocation9], 8
    %975 = vst [vmem:[%s974] sm:$0xf] %v973
    %s976 = scalar_lea.vmem [#allocation4], 12
    %v977 = vld [vmem:[%s976] sm:$0xf]
    %s978 = scalar_lea.vmem %s1, 24
    %v979 = vld [vmem:[%s978] sm:$0xff]
    %980 = vmatprep.subr.bf16.mxu0 %v220
    %981 = vmatpush1.bf16.msra.mxu0 %v219
    %982 = vmatprep.subr.bf16.mxu0 %v224
    %983 = vmatpush1.bf16.msra.mxu0 %v223
    %984 = vmatprep.subr.bf16.mxu0 %v228
    %985 = vmatpush1.bf16.msra.mxu0 %v227
    %986 = vmatprep.subr.bf16.mxu0 %v232
    %987 = vmatpush1.bf16.msra.mxu0 %v231
    %988 = vmatprep.subr.bf16.mxu0 %v236
    %989 = vmatpush1.bf16.msra.mxu0 %v235
    %990 = vmatprep.subr.bf16.mxu0 %v240
    %991 = vmatpush1.bf16.msra.mxu0 %v239
    %992 = vmatprep.subr.bf16.mxu0 %v244
    %993 = vmatpush1.bf16.msra.mxu0 %v243
    %994 = vmatprep.subr.bf16.mxu0 %v248
    %995 = vmatpush1.bf16.msra.mxu0 %v247
    %996 = vmatprep.subr.bf16.mxu0 0
    %997 = vmatpush1.bf16.msra.mxu0 0
    %998 = vmatprep.subr.bf16.mxu0 0
    %999 = vmatpush1.bf16.msra.mxu0 0
    %1000 = vmatprep.subr.bf16.mxu0 0
    %1001 = vmatpush1.bf16.msra.mxu0 0
    %1002 = vmatprep.subr.bf16.mxu0 0
    %1003 = vmatpush1.bf16.msra.mxu0 0
    %1004 = vmatprep.subr.bf16.mxu0 0
    %1005 = vmatpush1.bf16.msra.mxu0 0
    %1006 = vmatprep.subr.bf16.mxu0 0
    %1007 = vmatpush1.bf16.msra.mxu0 0
    %1008 = vmatprep.subr.bf16.mxu0 0
    %1009 = vmatpush1.bf16.msra.mxu0 0
    %1010 = vmatprep.subr.bf16.mxu0 0
    %1011 = vmatpush1.bf16.msra.mxu0 0
    %1012 = vmatprep.mubr.bf16.mxu0 0
    %1013 = vmatmul.mubr.bf16.gmra.mrb[0].mxu0 %v973
    %v1014 = vpop.f32.mrb[0].mxu0
    %v1015 = vadd.f32 0.0, %v1014
    %v1016 = vpop.f32.mrb[0].mxu0
    %v1017 = vadd.f32 0.0, %v1016
    %v1018 = vpop.f32.mrb[0].mxu0
    %v1019 = vpop.f32.mrb[0].mxu0
    %1020 = vdwg.mxu0
    %1021 = vmatprep.subr.bf16.mxu0 %v222
    %1022 = vmatpush1.bf16.msra.mxu0 %v221
    %1023 = vmatprep.subr.bf16.mxu0 %v226
    %1024 = vmatpush1.bf16.msra.mxu0 %v225
    %1025 = vmatprep.subr.bf16.mxu0 %v230
    %1026 = vmatpush1.bf16.msra.mxu0 %v229
    %1027 = vmatprep.subr.bf16.mxu0 %v234
    %1028 = vmatpush1.bf16.msra.mxu0 %v233
    %1029 = vmatprep.subr.bf16.mxu0 %v238
    %1030 = vmatpush1.bf16.msra.mxu0 %v237
    %1031 = vmatprep.subr.bf16.mxu0 %v242
    %1032 = vmatpush1.bf16.msra.mxu0 %v241
    %1033 = vmatprep.subr.bf16.mxu0 %v246
    %1034 = vmatpush1.bf16.msra.mxu0 %v245
    %1035 = vmatprep.subr.bf16.mxu0 %v250
    %1036 = vmatpush1.bf16.msra.mxu0 %v249
    %1037 = vmatprep.subr.bf16.mxu0 0
    %1038 = vmatpush1.bf16.msra.mxu0 0
    %1039 = vmatprep.subr.bf16.mxu0 0
    %1040 = vmatpush1.bf16.msra.mxu0 0
    %1041 = vmatprep.subr.bf16.mxu0 0
    %1042 = vmatpush1.bf16.msra.mxu0 0
    %1043 = vmatprep.subr.bf16.mxu0 0
    %1044 = vmatpush1.bf16.msra.mxu0 0
    %1045 = vmatprep.subr.bf16.mxu0 0
    %1046 = vmatpush1.bf16.msra.mxu0 0
    %1047 = vmatprep.subr.bf16.mxu0 0
    %1048 = vmatpush1.bf16.msra.mxu0 0
    %1049 = vmatprep.subr.bf16.mxu0 0
    %1050 = vmatpush1.bf16.msra.mxu0 0
    %1051 = vmatprep.subr.bf16.mxu0 0
    %1052 = vmatpush1.bf16.msra.mxu0 0
    %1053 = vmatprep.mubr.bf16.mxu0 0
    %1054 = vmatmul.mubr.bf16.gmra.mrb[0].mxu0 %v973
    %v1055 = vpop.f32.mrb[0].mxu0
    %v1056 = vadd.f32 0.0, %v1055
    %v1057 = vpop.f32.mrb[0].mxu0
    %v1058 = vadd.f32 0.0, %v1057
    %v1059 = vpop.f32.mrb[0].mxu0
    %v1060 = vpop.f32.mrb[0].mxu0
    %1061 = vdwg.mxu0
    %v1063 = vsel %vm405, %v977, 0
    %1065 = vmatprep.subr.bf16.mxu0 %v390
    %1066 = vmatpush1.bf16.msra.mxu0 %v389
    %1067 = vmatprep.subr.bf16.mxu0 %v394
    %1068 = vmatpush1.bf16.msra.mxu0 %v393
    %1069 = vmatprep.subr.bf16.mxu0 0
    %1070 = vmatpush1.bf16.msra.mxu0 0
    %1071 = vmatprep.subr.bf16.mxu0 0
    %1072 = vmatpush1.bf16.msra.mxu0 0
    %1073 = vmatprep.subr.bf16.mxu0 0
    %1074 = vmatpush1.bf16.msra.mxu0 0
    %1075 = vmatprep.subr.bf16.mxu0 0
    %1076 = vmatpush1.bf16.msra.mxu0 0
    %1077 = vmatprep.subr.bf16.mxu0 0
    %1078 = vmatpush1.bf16.msra.mxu0 0
    %1079 = vmatprep.subr.bf16.mxu0 0
    %1080 = vmatpush1.bf16.msra.mxu0 0
    %1081 = vmatprep.subr.bf16.mxu0 0
    %1082 = vmatpush1.bf16.msra.mxu0 0
    %1083 = vmatprep.subr.bf16.mxu0 0
    %1084 = vmatpush1.bf16.msra.mxu0 0
    %1085 = vmatprep.subr.bf16.mxu0 0
    %1086 = vmatpush1.bf16.msra.mxu0 0
    %1087 = vmatprep.subr.bf16.mxu0 0
    %1088 = vmatpush1.bf16.msra.mxu0 0
    %1089 = vmatprep.subr.bf16.mxu0 0
    %1090 = vmatpush1.bf16.msra.mxu0 0
    %1091 = vmatprep.subr.bf16.mxu0 0
    %1092 = vmatpush1.bf16.msra.mxu0 0
    %1093 = vmatprep.subr.bf16.mxu0 0
    %1094 = vmatpush1.bf16.msra.mxu0 0
    %1095 = vmatprep.subr.bf16.mxu0 0
    %1096 = vmatpush1.bf16.msra.mxu0 0
    %1097 = vmatprep.mubr.bf16.mxu0 0
    %1098 = vmatmul.mubr.bf16.gmra.mrb[0].mxu0 %v1063
    %v1099 = vpop.f32.mrb[0].mxu0
    %v1100 = vadd.f32 %v1015, %v1099
    %v1101 = vpop.f32.mrb[0].mxu0
    %v1102 = vadd.f32 %v1017, %v1101
    %v1103 = vpop.f32.mrb[0].mxu0
    %v1104 = vpop.f32.mrb[0].mxu0
    %1105 = vdwg.mxu0
    %1106 = vmatprep.subr.bf16.mxu0 %v392
    %1107 = vmatpush1.bf16.msra.mxu0 %v391
    %1108 = vmatprep.subr.bf16.mxu0 %v396
    %1109 = vmatpush1.bf16.msra.mxu0 %v395
    %1110 = vmatprep.subr.bf16.mxu0 0
    %1111 = vmatpush1.bf16.msra.mxu0 0
    %1112 = vmatprep.subr.bf16.mxu0 0
    %1113 = vmatpush1.bf16.msra.mxu0 0
    %1114 = vmatprep.subr.bf16.mxu0 0
    %1115 = vmatpush1.bf16.msra.mxu0 0
    %1116 = vmatprep.subr.bf16.mxu0 0
    %1117 = vmatpush1.bf16.msra.mxu0 0
    %1118 = vmatprep.subr.bf16.mxu0 0
    %1119 = vmatpush1.bf16.msra.mxu0 0
    %1120 = vmatprep.subr.bf16.mxu0 0
    %1121 = vmatpush1.bf16.msra.mxu0 0
    %1122 = vmatprep.subr.bf16.mxu0 0
    %1123 = vmatpush1.bf16.msra.mxu0 0
    %1124 = vmatprep.subr.bf16.mxu0 0
    %1125 = vmatpush1.bf16.msra.mxu0 0
    %1126 = vmatprep.subr.bf16.mxu0 0
    %1127 = vmatpush1.bf16.msra.mxu0 0
    %1128 = vmatprep.subr.bf16.mxu0 0
    %1129 = vmatpush1.bf16.msra.mxu0 0
    %1130 = vmatprep.subr.bf16.mxu0 0
    %1131 = vmatpush1.bf16.msra.mxu0 0
    %1132 = vmatprep.subr.bf16.mxu0 0
    %1133 = vmatpush1.bf16.msra.mxu0 0
    %1134 = vmatprep.subr.bf16.mxu0 0
    %1135 = vmatpush1.bf16.msra.mxu0 0
    %1136 = vmatprep.subr.bf16.mxu0 0
    %1137 = vmatpush1.bf16.msra.mxu0 0
    %1138 = vmatprep.mubr.bf16.mxu0 0
    %1139 = vmatmul.mubr.bf16.gmra.mrb[0].mxu0 %v1063
    %v1140 = vpop.f32.mrb[0].mxu0
    %v1141 = vadd.f32 %v1056, %v1140
    %v1142 = vpop.f32.mrb[0].mxu0
    %v1143 = vadd.f32 %v1058, %v1142
    %v1144 = vpop.f32.mrb[0].mxu0
    %v1145 = vpop.f32.mrb[0].mxu0
    %1146 = vdwg.mxu0
    %v1147 = vadd.f32 %v1100, %v101
    %v1148 = vadd.f32 %v1102, %v105
    %v1149 = vadd.f32 %v1141, %v109
    %v1150 = vadd.f32 %v1143, %v113
    %v1151 = vxor.u32 %v1147, 2147483648
    %v1152 = vmul.f32 %v1151, 1.442695
    %v1153 = vpow.pop %v1152
    %v1154 = vadd.f32 %v1153, 1.0
    %v1155 = vrcp.pop %v1154
    %v1156 = vmul.f32 1.0, %v1155
    %v1157 = vxor.u32 %v1148, 2147483648
    %v1158 = vmul.f32 %v1157, 1.442695
    %v1159 = vpow.pop %v1158
    %v1160 = vadd.f32 %v1159, 1.0
    %v1161 = vrcp.pop %v1160
    %v1162 = vmul.f32 1.0, %v1161
    %v1163 = vtanh.pop %v1149
    %v1164 = vxor.u32 %v1150, 2147483648
    %v1165 = vmul.f32 %v1164, 1.442695
    %v1166 = vpow.pop %v1165
    %v1167 = vadd.f32 %v1166, 1.0
    %v1168 = vrcp.pop %v1167
    %v1169 = vmul.f32 1.0, %v1168
    %v1170 = vmul.f32 %v1162, %v969
    %v1171 = vmul.f32 %v1156, %v1163
    %v1172 = vadd.f32 %v1170, %v1171
    %v1173 = vtanh.pop %v1172
    %v1174 = vmul.f32 %v1169, %v1173
    %1176 = vset.pattern.permute.xlu0 0
    %1177 = vperm.xlu0 %1176, %v979
    %v1178 = vpop.permute.xlu0 %1177
    %v1180 = vmul.f32 %v1178, %v1172
    %v1181 = vsub.f32 1.0, %v979
    %1183 = vset.pattern.permute.xlu0 0
    %1184 = vperm.xlu0 %1183, %v1181
    %v1185 = vpop.permute.xlu0 %1184
    %v1187 = vmul.f32 %v1185, %v969
    %v1188 = vadd.f32 %v1180, %v1187
    %v1189 = vmul.f32 %v1178, %v1174
    %v1190 = vmul.f32 %v1185, %v972
    %v1191 = vadd.f32 %v1189, %v1190
    %v1192 = vpack.c.bf16 %v1191, %v1191
    %s1193 = scalar_lea.vmem [#allocation9], 12
    %1194 = vst [vmem:[%s1193] sm:$0xf] %v1192
    %s1195 = scalar_lea.vmem [#allocation4], 16
    %v1196 = vld [vmem:[%s1195] sm:$0xf]
    %s1197 = scalar_lea.vmem %s1, 32
    %v1198 = vld [vmem:[%s1197] sm:$0xff]
    %1199 = vmatprep.subr.bf16.mxu0 %v220
    %1200 = vmatpush1.bf16.msra.mxu0 %v219
    %1201 = vmatprep.subr.bf16.mxu0 %v224
    %1202 = vmatpush1.bf16.msra.mxu0 %v223
    %1203 = vmatprep.subr.bf16.mxu0 %v228
    %1204 = vmatpush1.bf16.msra.mxu0 %v227
    %1205 = vmatprep.subr.bf16.mxu0 %v232
    %1206 = vmatpush1.bf16.msra.mxu0 %v231
    %1207 = vmatprep.subr.bf16.mxu0 %v236
    %1208 = vmatpush1.bf16.msra.mxu0 %v235
    %1209 = vmatprep.subr.bf16.mxu0 %v240
    %1210 = vmatpush1.bf16.msra.mxu0 %v239
    %1211 = vmatprep.subr.bf16.mxu0 %v244
    %1212 = vmatpush1.bf16.msra.mxu0 %v243
    %1213 = vmatprep.subr.bf16.mxu0 %v248
    %1214 = vmatpush1.bf16.msra.mxu0 %v247
    %1215 = vmatprep.subr.bf16.mxu0 0
    %1216 = vmatpush1.bf16.msra.mxu0 0
    %1217 = vmatprep.subr.bf16.mxu0 0
    %1218 = vmatpush1.bf16.msra.mxu0 0
    %1219 = vmatprep.subr.bf16.mxu0 0
    %1220 = vmatpush1.bf16.msra.mxu0 0
    %1221 = vmatprep.subr.bf16.mxu0 0
    %1222 = vmatpush1.bf16.msra.mxu0 0
    %1223 = vmatprep.subr.bf16.mxu0 0
    %1224 = vmatpush1.bf16.msra.mxu0 0
    %1225 = vmatprep.subr.bf16.mxu0 0
    %1226 = vmatpush1.bf16.msra.mxu0 0
    %1227 = vmatprep.subr.bf16.mxu0 0
    %1228 = vmatpush1.bf16.msra.mxu0 0
    %1229 = vmatprep.subr.bf16.mxu0 0
    %1230 = vmatpush1.bf16.msra.mxu0 0
    %1231 = vmatprep.mubr.bf16.mxu0 0
    %1232 = vmatmul.mubr.bf16.gmra.mrb[0].mxu0 %v1192
    %v1233 = vpop.f32.mrb[0].mxu0
    %v1234 = vadd.f32 0.0, %v1233
    %v1235 = vpop.f32.mrb[0].mxu0
    %v1236 = vadd.f32 0.0, %v1235
    %v1237 = vpop.f32.mrb[0].mxu0
    %v1238 = vpop.f32.mrb[0].mxu0
    %1239 = vdwg.mxu0
    %1240 = vmatprep.subr.bf16.mxu0 %v222
    %1241 = vmatpush1.bf16.msra.mxu0 %v221
    %1242 = vmatprep.subr.bf16.mxu0 %v226
    %1243 = vmatpush1.bf16.msra.mxu0 %v225
    %1244 = vmatprep.subr.bf16.mxu0 %v230
    %1245 = vmatpush1.bf16.msra.mxu0 %v229
    %1246 = vmatprep.subr.bf16.mxu0 %v234
    %1247 = vmatpush1.bf16.msra.mxu0 %v233
    %1248 = vmatprep.subr.bf16.mxu0 %v238
    %1249 = vmatpush1.bf16.msra.mxu0 %v237
    %1250 = vmatprep.subr.bf16.mxu0 %v242
    %1251 = vmatpush1.bf16.msra.mxu0 %v241
    %1252 = vmatprep.subr.bf16.mxu0 %v246
    %1253 = vmatpush1.bf16.msra.mxu0 %v245
    %1254 = vmatprep.subr.bf16.mxu0 %v250
    %1255 = vmatpush1.bf16.msra.mxu0 %v249
    %1256 = vmatprep.subr.bf16.mxu0 0
    %1257 = vmatpush1.bf16.msra.mxu0 0
    %1258 = vmatprep.subr.bf16.mxu0 0
    %1259 = vmatpush1.bf16.msra.mxu0 0
    %1260 = vmatprep.subr.bf16.mxu0 0
    %1261 = vmatpush1.bf16.msra.mxu0 0
    %1262 = vmatprep.subr.bf16.mxu0 0
    %1263 = vmatpush1.bf16.msra.mxu0 0
    %1264 = vmatprep.subr.bf16.mxu0 0
    %1265 = vmatpush1.bf16.msra.mxu0 0
    %1266 = vmatprep.subr.bf16.mxu0 0
    %1267 = vmatpush1.bf16.msra.mxu0 0
    %1268 = vmatprep.subr.bf16.mxu0 0
    %1269 = vmatpush1.bf16.msra.mxu0 0
    %1270 = vmatprep.subr.bf16.mxu0 0
    %1271 = vmatpush1.bf16.msra.mxu0 0
    %1272 = vmatprep.mubr.bf16.mxu0 0
    %1273 = vmatmul.mubr.bf16.gmra.mrb[0].mxu0 %v1192
    %v1274 = vpop.f32.mrb[0].mxu0
    %v1275 = vadd.f32 0.0, %v1274
    %v1276 = vpop.f32.mrb[0].mxu0
    %v1277 = vadd.f32 0.0, %v1276
    %v1278 = vpop.f32.mrb[0].mxu0
    %v1279 = vpop.f32.mrb[0].mxu0
    %1280 = vdwg.mxu0
    %v1282 = vsel %vm405, %v1196, 0
    %1284 = vmatprep.subr.bf16.mxu0 %v390
    %1285 = vmatpush1.bf16.msra.mxu0 %v389
    %1286 = vmatprep.subr.bf16.mxu0 %v394
    %1287 = vmatpush1.bf16.msra.mxu0 %v393
    %1288 = vmatprep.subr.bf16.mxu0 0
    %1289 = vmatpush1.bf16.msra.mxu0 0
    %1290 = vmatprep.subr.bf16.mxu0 0
    %1291 = vmatpush1.bf16.msra.mxu0 0
    %1292 = vmatprep.subr.bf16.mxu0 0
    %1293 = vmatpush1.bf16.msra.mxu0 0
    %1294 = vmatprep.subr.bf16.mxu0 0
    %1295 = vmatpush1.bf16.msra.mxu0 0
    %1296 = vmatprep.subr.bf16.mxu0 0
    %1297 = vmatpush1.bf16.msra.mxu0 0
    %1298 = vmatprep.subr.bf16.mxu0 0
    %1299 = vmatpush1.bf16.msra.mxu0 0
    %1300 = vmatprep.subr.bf16.mxu0 0
    %1301 = vmatpush1.bf16.msra.mxu0 0
    %1302 = vmatprep.subr.bf16.mxu0 0
    %1303 = vmatpush1.bf16.msra.mxu0 0
    %1304 = vmatprep.subr.bf16.mxu0 0
    %1305 = vmatpush1.bf16.msra.mxu0 0
    %1306 = vmatprep.subr.bf16.mxu0 0
    %1307 = vmatpush1.bf16.msra.mxu0 0
    %1308 = vmatprep.subr.bf16.mxu0 0
    %1309 = vmatpush1.bf16.msra.mxu0 0
    %1310 = vmatprep.subr.bf16.mxu0 0
    %1311 = vmatpush1.bf16.msra.mxu0 0
    %1312 = vmatprep.subr.bf16.mxu0 0
    %1313 = vmatpush1.bf16.msra.mxu0 0
    %1314 = vmatprep.subr.bf16.mxu0 0
    %1315 = vmatpush1.bf16.msra.mxu0 0
    %1316 = vmatprep.mubr.bf16.mxu0 0
    %1317 = vmatmul.mubr.bf16.gmra.mrb[0].mxu0 %v1282
    %v1318 = vpop.f32.mrb[0].mxu0
    %v1319 = vadd.f32 %v1234, %v1318
    %v1320 = vpop.f32.mrb[0].mxu0
    %v1321 = vadd.f32 %v1236, %v1320
    %v1322 = vpop.f32.mrb[0].mxu0
    %v1323 = vpop.f32.mrb[0].mxu0
    %1324 = vdwg.mxu0
    %1325 = vmatprep.subr.bf16.mxu0 %v392
    %1326 = vmatpush1.bf16.msra.mxu0 %v391
    %1327 = vmatprep.subr.bf16.mxu0 %v396
    %1328 = vmatpush1.bf16.msra.mxu0 %v395
    %1329 = vmatprep.subr.bf16.mxu0 0
    %1330 = vmatpush1.bf16.msra.mxu0 0
    %1331 = vmatprep.subr.bf16.mxu0 0
    %1332 = vmatpush1.bf16.msra.mxu0 0
    %1333 = vmatprep.subr.bf16.mxu0 0
    %1334 = vmatpush1.bf16.msra.mxu0 0
    %1335 = vmatprep.subr.bf16.mxu0 0
    %1336 = vmatpush1.bf16.msra.mxu0 0
    %1337 = vmatprep.subr.bf16.mxu0 0
    %1338 = vmatpush1.bf16.msra.mxu0 0
    %1339 = vmatprep.subr.bf16.mxu0 0
    %1340 = vmatpush1.bf16.msra.mxu0 0
    %1341 = vmatprep.subr.bf16.mxu0 0
    %1342 = vmatpush1.bf16.msra.mxu0 0
    %1343 = vmatprep.subr.bf16.mxu0 0
    %1344 = vmatpush1.bf16.msra.mxu0 0
    %1345 = vmatprep.subr.bf16.mxu0 0
    %1346 = vmatpush1.bf16.msra.mxu0 0
    %1347 = vmatprep.subr.bf16.mxu0 0
    %1348 = vmatpush1.bf16.msra.mxu0 0
    %1349 = vmatprep.subr.bf16.mxu0 0
    %1350 = vmatpush1.bf16.msra.mxu0 0
    %1351 = vmatprep.subr.bf16.mxu0 0
    %1352 = vmatpush1.bf16.msra.mxu0 0
    %1353 = vmatprep.subr.bf16.mxu0 0
    %1354 = vmatpush1.bf16.msra.mxu0 0
    %1355 = vmatprep.subr.bf16.mxu0 0
    %1356 = vmatpush1.bf16.msra.mxu0 0
    %1357 = vmatprep.mubr.bf16.mxu0 0
    %1358 = vmatmul.mubr.bf16.gmra.mrb[0].mxu0 %v1282
    %v1359 = vpop.f32.mrb[0].mxu0
    %v1360 = vadd.f32 %v1275, %v1359
    %v1361 = vpop.f32.mrb[0].mxu0
    %v1362 = vadd.f32 %v1277, %v1361
    %v1363 = vpop.f32.mrb[0].mxu0
    %v1364 = vpop.f32.mrb[0].mxu0
    %1365 = vdwg.mxu0
    %v1366 = vadd.f32 %v1319, %v101
    %v1367 = vadd.f32 %v1321, %v105
    %v1368 = vadd.f32 %v1360, %v109
    %v1369 = vadd.f32 %v1362, %v113
    %v1370 = vxor.u32 %v1366, 2147483648
    %v1371 = vmul.f32 %v1370, 1.442695
    %v1372 = vpow.pop %v1371
    %v1373 = vadd.f32 %v1372, 1.0
    %v1374 = vrcp.pop %v1373
    %v1375 = vmul.f32 1.0, %v1374
    %v1376 = vxor.u32 %v1367, 2147483648
    %v1377 = vmul.f32 %v1376, 1.442695
    %v1378 = vpow.pop %v1377
    %v1379 = vadd.f32 %v1378, 1.0
    %v1380 = vrcp.pop %v1379
    %v1381 = vmul.f32 1.0, %v1380
    %v1382 = vtanh.pop %v1368
    %v1383 = vxor.u32 %v1369, 2147483648
    %v1384 = vmul.f32 %v1383, 1.442695
    %v1385 = vpow.pop %v1384
    %v1386 = vadd.f32 %v1385, 1.0
    %v1387 = vrcp.pop %v1386
    %v1388 = vmul.f32 1.0, %v1387
    %v1389 = vmul.f32 %v1381, %v1188
    %v1390 = vmul.f32 %v1375, %v1382
    %v1391 = vadd.f32 %v1389, %v1390
    %v1392 = vtanh.pop %v1391
    %v1393 = vmul.f32 %v1388, %v1392
    %1395 = vset.pattern.permute.xlu0 0
    %1396 = vperm.xlu0 %1395, %v1198
    %v1397 = vpop.permute.xlu0 %1396
    %v1399 = vmul.f32 %v1397, %v1391
    %v1400 = vsub.f32 1.0, %v1198
    %1402 = vset.pattern.permute.xlu0 0
    %1403 = vperm.xlu0 %1402, %v1400
    %v1404 = vpop.permute.xlu0 %1403
    %v1406 = vmul.f32 %v1404, %v1188
    %v1407 = vadd.f32 %v1399, %v1406
    %v1408 = vmul.f32 %v1397, %v1393
    %v1409 = vmul.f32 %v1404, %v1191
    %v1410 = vadd.f32 %v1408, %v1409
    %v1411 = vpack.c.bf16 %v1410, %v1410
    %s1412 = scalar_lea.vmem [#allocation9], 16
    %1413 = vst [vmem:[%s1412] sm:$0xf] %v1411
    %s1414 = scalar_lea.vmem [#allocation4], 20
    %v1415 = vld [vmem:[%s1414] sm:$0xf]
    %s1416 = scalar_lea.vmem %s1, 40
    %v1417 = vld [vmem:[%s1416] sm:$0xff]
    %1418 = vmatprep.subr.bf16.mxu0 %v220
    %1419 = vmatpush1.bf16.msra.mxu0 %v219
    %1420 = vmatprep.subr.bf16.mxu0 %v224
    %1421 = vmatpush1.bf16.msra.mxu0 %v223
    %1422 = vmatprep.subr.bf16.mxu0 %v228
    %1423 = vmatpush1.bf16.msra.mxu0 %v227
    %1424 = vmatprep.subr.bf16.mxu0 %v232
    %1425 = vmatpush1.bf16.msra.mxu0 %v231
    %1426 = vmatprep.subr.bf16.mxu0 %v236
    %1427 = vmatpush1.bf16.msra.mxu0 %v235
    %1428 = vmatprep.subr.bf16.mxu0 %v240
    %1429 = vmatpush1.bf16.msra.mxu0 %v239
    %1430 = vmatprep.subr.bf16.mxu0 %v244
    %1431 = vmatpush1.bf16.msra.mxu0 %v243
    %1432 = vmatprep.subr.bf16.mxu0 %v248
    %1433 = vmatpush1.bf16.msra.mxu0 %v247
    %1434 = vmatprep.subr.bf16.mxu0 0
    %1435 = vmatpush1.bf16.msra.mxu0 0
    %1436 = vmatprep.subr.bf16.mxu0 0
    %1437 = vmatpush1.bf16.msra.mxu0 0
    %1438 = vmatprep.subr.bf16.mxu0 0
    %1439 = vmatpush1.bf16.msra.mxu0 0
    %1440 = vmatprep.subr.bf16.mxu0 0
    %1441 = vmatpush1.bf16.msra.mxu0 0
    %1442 = vmatprep.subr.bf16.mxu0 0
    %1443 = vmatpush1.bf16.msra.mxu0 0
    %1444 = vmatprep.subr.bf16.mxu0 0
    %1445 = vmatpush1.bf16.msra.mxu0 0
    %1446 = vmatprep.subr.bf16.mxu0 0
    %1447 = vmatpush1.bf16.msra.mxu0 0
    %1448 = vmatprep.subr.bf16.mxu0 0
    %1449 = vmatpush1.bf16.msra.mxu0 0
    %1450 = vmatprep.mubr.bf16.mxu0 0
    %1451 = vmatmul.mubr.bf16.gmra.mrb[0].mxu0 %v1411
    %v1452 = vpop.f32.mrb[0].mxu0
    %v1453 = vadd.f32 0.0, %v1452
    %v1454 = vpop.f32.mrb[0].mxu0
    %v1455 = vadd.f32 0.0, %v1454
    %v1456 = vpop.f32.mrb[0].mxu0
    %v1457 = vpop.f32.mrb[0].mxu0
    %1458 = vdwg.mxu0
    %1459 = vmatprep.subr.bf16.mxu0 %v222
    %1460 = vmatpush1.bf16.msra.mxu0 %v221
    %1461 = vmatprep.subr.bf16.mxu0 %v226
    %1462 = vmatpush1.bf16.msra.mxu0 %v225
    %1463 = vmatprep.subr.bf16.mxu0 %v230
    %1464 = vmatpush1.bf16.msra.mxu0 %v229
    %1465 = vmatprep.subr.bf16.mxu0 %v234
    %1466 = vmatpush1.bf16.msra.mxu0 %v233
    %1467 = vmatprep.subr.bf16.mxu0 %v238
    %1468 = vmatpush1.bf16.msra.mxu0 %v237
    %1469 = vmatprep.subr.bf16.mxu0 %v242
    %1470 = vmatpush1.bf16.msra.mxu0 %v241
    %1471 = vmatprep.subr.bf16.mxu0 %v246
    %1472 = vmatpush1.bf16.msra.mxu0 %v245
    %1473 = vmatprep.subr.bf16.mxu0 %v250
    %1474 = vmatpush1.bf16.msra.mxu0 %v249
    %1475 = vmatprep.subr.bf16.mxu0 0
    %1476 = vmatpush1.bf16.msra.mxu0 0
    %1477 = vmatprep.subr.bf16.mxu0 0
    %1478 = vmatpush1.bf16.msra.mxu0 0
    %1479 = vmatprep.subr.bf16.mxu0 0
    %1480 = vmatpush1.bf16.msra.mxu0 0
    %1481 = vmatprep.subr.bf16.mxu0 0
    %1482 = vmatpush1.bf16.msra.mxu0 0
    %1483 = vmatprep.subr.bf16.mxu0 0
    %1484 = vmatpush1.bf16.msra.mxu0 0
    %1485 = vmatprep.subr.bf16.mxu0 0
    %1486 = vmatpush1.bf16.msra.mxu0 0
    %1487 = vmatprep.subr.bf16.mxu0 0
    %1488 = vmatpush1.bf16.msra.mxu0 0
    %1489 = vmatprep.subr.bf16.mxu0 0
    %1490 = vmatpush1.bf16.msra.mxu0 0
    %1491 = vmatprep.mubr.bf16.mxu0 0
    %1492 = vmatmul.mubr.bf16.gmra.mrb[0].mxu0 %v1411
    %v1493 = vpop.f32.mrb[0].mxu0
    %v1494 = vadd.f32 0.0, %v1493
    %v1495 = vpop.f32.mrb[0].mxu0
    %v1496 = vadd.f32 0.0, %v1495
    %v1497 = vpop.f32.mrb[0].mxu0
    %v1498 = vpop.f32.mrb[0].mxu0
    %1499 = vdwg.mxu0
    %v1501 = vsel %vm405, %v1415, 0
    %1503 = vmatprep.subr.bf16.mxu0 %v390
    %1504 = vmatpush1.bf16.msra.mxu0 %v389
    %1505 = vmatprep.subr.bf16.mxu0 %v394
    %1506 = vmatpush1.bf16.msra.mxu0 %v393
    %1507 = vmatprep.subr.bf16.mxu0 0
    %1508 = vmatpush1.bf16.msra.mxu0 0
    %1509 = vmatprep.subr.bf16.mxu0 0
    %1510 = vmatpush1.bf16.msra.mxu0 0
    %1511 = vmatprep.subr.bf16.mxu0 0
    %1512 = vmatpush1.bf16.msra.mxu0 0
    %1513 = vmatprep.subr.bf16.mxu0 0
    %1514 = vmatpush1.bf16.msra.mxu0 0
    %1515 = vmatprep.subr.bf16.mxu0 0
    %1516 = vmatpush1.bf16.msra.mxu0 0
    %1517 = vmatprep.subr.bf16.mxu0 0
    %1518 = vmatpush1.bf16.msra.mxu0 0
    %1519 = vmatprep.subr.bf16.mxu0 0
    %1520 = vmatpush1.bf16.msra.mxu0 0
    %1521 = vmatprep.subr.bf16.mxu0 0
    %1522 = vmatpush1.bf16.msra.mxu0 0
    %1523 = vmatprep.subr.bf16.mxu0 0
    %1524 = vmatpush1.bf16.msra.mxu0 0
    %1525 = vmatprep.subr.bf16.mxu0 0
    %1526 = vmatpush1.bf16.msra.mxu0 0
    %1527 = vmatprep.subr.bf16.mxu0 0
    %1528 = vmatpush1.bf16.msra.mxu0 0
    %1529 = vmatprep.subr.bf16.mxu0 0
    %1530 = vmatpush1.bf16.msra.mxu0 0
    %1531 = vmatprep.subr.bf16.mxu0 0
    %1532 = vmatpush1.bf16.msra.mxu0 0
    %1533 = vmatprep.subr.bf16.mxu0 0
    %1534 = vmatpush1.bf16.msra.mxu0 0
    %1535 = vmatprep.mubr.bf16.mxu0 0
    %1536 = vmatmul.mubr.bf16.gmra.mrb[0].mxu0 %v1501
    %v1537 = vpop.f32.mrb[0].mxu0
    %v1538 = vadd.f32 %v1453, %v1537
    %v1539 = vpop.f32.mrb[0].mxu0
    %v1540 = vadd.f32 %v1455, %v1539
    %v1541 = vpop.f32.mrb[0].mxu0
    %v1542 = vpop.f32.mrb[0].mxu0
    %1543 = vdwg.mxu0
    %1544 = vmatprep.subr.bf16.mxu0 %v392
    %1545 = vmatpush1.bf16.msra.mxu0 %v391
    %1546 = vmatprep.subr.bf16.mxu0 %v396
    %1547 = vmatpush1.bf16.msra.mxu0 %v395
    %1548 = vmatprep.subr.bf16.mxu0 0
    %1549 = vmatpush1.bf16.msra.mxu0 0
    %1550 = vmatprep.subr.bf16.mxu0 0
    %1551 = vmatpush1.bf16.msra.mxu0 0
    %1552 = vmatprep.subr.bf16.mxu0 0
    %1553 = vmatpush1.bf16.msra.mxu0 0
    %1554 = vmatprep.subr.bf16.mxu0 0
    %1555 = vmatpush1.bf16.msra.mxu0 0
    %1556 = vmatprep.subr.bf16.mxu0 0
    %1557 = vmatpush1.bf16.msra.mxu0 0
    %1558 = vmatprep.subr.bf16.mxu0 0
    %1559 = vmatpush1.bf16.msra.mxu0 0
    %1560 = vmatprep.subr.bf16.mxu0 0
    %1561 = vmatpush1.bf16.msra.mxu0 0
    %1562 = vmatprep.subr.bf16.mxu0 0
    %1563 = vmatpush1.bf16.msra.mxu0 0
    %1564 = vmatprep.subr.bf16.mxu0 0
    %1565 = vmatpush1.bf16.msra.mxu0 0
    %1566 = vmatprep.subr.bf16.mxu0 0
    %1567 = vmatpush1.bf16.msra.mxu0 0
    %1568 = vmatprep.subr.bf16.mxu0 0
    %1569 = vmatpush1.bf16.msra.mxu0 0
    %1570 = vmatprep.subr.bf16.mxu0 0
    %1571 = vmatpush1.bf16.msra.mxu0 0
    %1572 = vmatprep.subr.bf16.mxu0 0
    %1573 = vmatpush1.bf16.msra.mxu0 0
    %1574 = vmatprep.subr.bf16.mxu0 0
    %1575 = vmatpush1.bf16.msra.mxu0 0
    %1576 = vmatprep.mubr.bf16.mxu0 0
    %1577 = vmatmul.mubr.bf16.gmra.mrb[0].mxu0 %v1501
    %v1578 = vpop.f32.mrb[0].mxu0
    %v1579 = vadd.f32 %v1494, %v1578
    %v1580 = vpop.f32.mrb[0].mxu0
    %v1581 = vadd.f32 %v1496, %v1580
    %v1582 = vpop.f32.mrb[0].mxu0
    %v1583 = vpop.f32.mrb[0].mxu0
    %1584 = vdwg.mxu0
    %v1585 = vadd.f32 %v1538, %v101
    %v1586 = vadd.f32 %v1540, %v105
    %v1587 = vadd.f32 %v1579, %v109
    %v1588 = vadd.f32 %v1581, %v113
    %v1589 = vxor.u32 %v1585, 2147483648
    %v1590 = vmul.f32 %v1589, 1.442695
    %v1591 = vpow.pop %v1590
    %v1592 = vadd.f32 %v1591, 1.0
    %v1593 = vrcp.pop %v1592
    %v1594 = vmul.f32 1.0, %v1593
    %v1595 = vxor.u32 %v1586, 2147483648
    %v1596 = vmul.f32 %v1595, 1.442695
    %v1597 = vpow.pop %v1596
    %v1598 = vadd.f32 %v1597, 1.0
    %v1599 = vrcp.pop %v1598
    %v1600 = vmul.f32 1.0, %v1599
    %v1601 = vtanh.pop %v1587
    %v1602 = vxor.u32 %v1588, 2147483648
    %v1603 = vmul.f32 %v1602, 1.442695
    %v1604 = vpow.pop %v1603
    %v1605 = vadd.f32 %v1604, 1.0
    %v1606 = vrcp.pop %v1605
    %v1607 = vmul.f32 1.0, %v1606
    %v1608 = vmul.f32 %v1600, %v1407
    %v1609 = vmul.f32 %v1594, %v1601
    %v1610 = vadd.f32 %v1608, %v1609
    %v1611 = vtanh.pop %v1610
    %v1612 = vmul.f32 %v1607, %v1611
    %1614 = vset.pattern.permute.xlu0 0
    %1615 = vperm.xlu0 %1614, %v1417
    %v1616 = vpop.permute.xlu0 %1615
    %v1618 = vmul.f32 %v1616, %v1610
    %v1619 = vsub.f32 1.0, %v1417
    %1621 = vset.pattern.permute.xlu0 0
    %1622 = vperm.xlu0 %1621, %v1619
    %v1623 = vpop.permute.xlu0 %1622
    %v1625 = vmul.f32 %v1623, %v1407
    %v1626 = vadd.f32 %v1618, %v1625
    %v1627 = vmul.f32 %v1616, %v1612
    %v1628 = vmul.f32 %v1623, %v1410
    %v1629 = vadd.f32 %v1627, %v1628
    %v1630 = vpack.c.bf16 %v1629, %v1629
    %s1631 = scalar_lea.vmem [#allocation9], 20
    %1632 = vst [vmem:[%s1631] sm:$0xf] %v1630
    %s1633 = scalar_lea.vmem [#allocation4], 24
    %v1634 = vld [vmem:[%s1633] sm:$0xf]
    %s1635 = scalar_lea.vmem %s1, 48
    %v1636 = vld [vmem:[%s1635] sm:$0xff]
    %1637 = vmatprep.subr.bf16.mxu0 %v220
    %1638 = vmatpush1.bf16.msra.mxu0 %v219
    %1639 = vmatprep.subr.bf16.mxu0 %v224
    %1640 = vmatpush1.bf16.msra.mxu0 %v223
    %1641 = vmatprep.subr.bf16.mxu0 %v228
    %1642 = vmatpush1.bf16.msra.mxu0 %v227
    %1643 = vmatprep.subr.bf16.mxu0 %v232
    %1644 = vmatpush1.bf16.msra.mxu0 %v231
    %1645 = vmatprep.subr.bf16.mxu0 %v236
    %1646 = vmatpush1.bf16.msra.mxu0 %v235
    %1647 = vmatprep.subr.bf16.mxu0 %v240
    %1648 = vmatpush1.bf16.msra.mxu0 %v239
    %1649 = vmatprep.subr.bf16.mxu0 %v244
    %1650 = vmatpush1.bf16.msra.mxu0 %v243
    %1651 = vmatprep.subr.bf16.mxu0 %v248
    %1652 = vmatpush1.bf16.msra.mxu0 %v247
    %1653 = vmatprep.subr.bf16.mxu0 0
    %1654 = vmatpush1.bf16.msra.mxu0 0
    %1655 = vmatprep.subr.bf16.mxu0 0
    %1656 = vmatpush1.bf16.msra.mxu0 0
    %1657 = vmatprep.subr.bf16.mxu0 0
    %1658 = vmatpush1.bf16.msra.mxu0 0
    %1659 = vmatprep.subr.bf16.mxu0 0
    %1660 = vmatpush1.bf16.msra.mxu0 0
    %1661 = vmatprep.subr.bf16.mxu0 0
    %1662 = vmatpush1.bf16.msra.mxu0 0
    %1663 = vmatprep.subr.bf16.mxu0 0
    %1664 = vmatpush1.bf16.msra.mxu0 0
    %1665 = vmatprep.subr.bf16.mxu0 0
    %1666 = vmatpush1.bf16.msra.mxu0 0
    %1667 = vmatprep.subr.bf16.mxu0 0
    %1668 = vmatpush1.bf16.msra.mxu0 0
    %1669 = vmatprep.mubr.bf16.mxu0 0
    %1670 = vmatmul.mubr.bf16.gmra.mrb[0].mxu0 %v1630
    %v1671 = vpop.f32.mrb[0].mxu0
    %v1672 = vadd.f32 0.0, %v1671
    %v1673 = vpop.f32.mrb[0].mxu0
    %v1674 = vadd.f32 0.0, %v1673
    %v1675 = vpop.f32.mrb[0].mxu0
    %v1676 = vpop.f32.mrb[0].mxu0
    %1677 = vdwg.mxu0
    %1678 = vmatprep.subr.bf16.mxu0 %v222
    %1679 = vmatpush1.bf16.msra.mxu0 %v221
    %1680 = vmatprep.subr.bf16.mxu0 %v226
    %1681 = vmatpush1.bf16.msra.mxu0 %v225
    %1682 = vmatprep.subr.bf16.mxu0 %v230
    %1683 = vmatpush1.bf16.msra.mxu0 %v229
    %1684 = vmatprep.subr.bf16.mxu0 %v234
    %1685 = vmatpush1.bf16.msra.mxu0 %v233
    %1686 = vmatprep.subr.bf16.mxu0 %v238
    %1687 = vmatpush1.bf16.msra.mxu0 %v237
    %1688 = vmatprep.subr.bf16.mxu0 %v242
    %1689 = vmatpush1.bf16.msra.mxu0 %v241
    %1690 = vmatprep.subr.bf16.mxu0 %v246
    %1691 = vmatpush1.bf16.msra.mxu0 %v245
    %1692 = vmatprep.subr.bf16.mxu0 %v250
    %1693 = vmatpush1.bf16.msra.mxu0 %v249
    %1694 = vmatprep.subr.bf16.mxu0 0
    %1695 = vmatpush1.bf16.msra.mxu0 0
    %1696 = vmatprep.subr.bf16.mxu0 0
    %1697 = vmatpush1.bf16.msra.mxu0 0
    %1698 = vmatprep.subr.bf16.mxu0 0
    %1699 = vmatpush1.bf16.msra.mxu0 0
    %1700 = vmatprep.subr.bf16.mxu0 0
    %1701 = vmatpush1.bf16.msra.mxu0 0
    %1702 = vmatprep.subr.bf16.mxu0 0
    %1703 = vmatpush1.bf16.msra.mxu0 0
    %1704 = vmatprep.subr.bf16.mxu0 0
    %1705 = vmatpush1.bf16.msra.mxu0 0
    %1706 = vmatprep.subr.bf16.mxu0 0
    %1707 = vmatpush1.bf16.msra.mxu0 0
    %1708 = vmatprep.subr.bf16.mxu0 0
    %1709 = vmatpush1.bf16.msra.mxu0 0
    %1710 = vmatprep.mubr.bf16.mxu0 0
    %1711 = vmatmul.mubr.bf16.gmra.mrb[0].mxu0 %v1630
    %v1712 = vpop.f32.mrb[0].mxu0
    %v1713 = vadd.f32 0.0, %v1712
    %v1714 = vpop.f32.mrb[0].mxu0
    %v1715 = vadd.f32 0.0, %v1714
    %v1716 = vpop.f32.mrb[0].mxu0
    %v1717 = vpop.f32.mrb[0].mxu0
    %1718 = vdwg.mxu0
    %v1720 = vsel %vm405, %v1634, 0
    %1722 = vmatprep.subr.bf16.mxu0 %v390
    %1723 = vmatpush1.bf16.msra.mxu0 %v389
    %1724 = vmatprep.subr.bf16.mxu0 %v394
    %1725 = vmatpush1.bf16.msra.mxu0 %v393
    %1726 = vmatprep.subr.bf16.mxu0 0
    %1727 = vmatpush1.bf16.msra.mxu0 0
    %1728 = vmatprep.subr.bf16.mxu0 0
    %1729 = vmatpush1.bf16.msra.mxu0 0
    %1730 = vmatprep.subr.bf16.mxu0 0
    %1731 = vmatpush1.bf16.msra.mxu0 0
    %1732 = vmatprep.subr.bf16.mxu0 0
    %1733 = vmatpush1.bf16.msra.mxu0 0
    %1734 = vmatprep.subr.bf16.mxu0 0
    %1735 = vmatpush1.bf16.msra.mxu0 0
    %1736 = vmatprep.subr.bf16.mxu0 0
    %1737 = vmatpush1.bf16.msra.mxu0 0
    %1738 = vmatprep.subr.bf16.mxu0 0
    %1739 = vmatpush1.bf16.msra.mxu0 0
    %1740 = vmatprep.subr.bf16.mxu0 0
    %1741 = vmatpush1.bf16.msra.mxu0 0
    %1742 = vmatprep.subr.bf16.mxu0 0
    %1743 = vmatpush1.bf16.msra.mxu0 0
    %1744 = vmatprep.subr.bf16.mxu0 0
    %1745 = vmatpush1.bf16.msra.mxu0 0
    %1746 = vmatprep.subr.bf16.mxu0 0
    %1747 = vmatpush1.bf16.msra.mxu0 0
    %1748 = vmatprep.subr.bf16.mxu0 0
    %1749 = vmatpush1.bf16.msra.mxu0 0
    %1750 = vmatprep.subr.bf16.mxu0 0
    %1751 = vmatpush1.bf16.msra.mxu0 0
    %1752 = vmatprep.subr.bf16.mxu0 0
    %1753 = vmatpush1.bf16.msra.mxu0 0
    %1754 = vmatprep.mubr.bf16.mxu0 0
    %1755 = vmatmul.mubr.bf16.gmra.mrb[0].mxu0 %v1720
    %v1756 = vpop.f32.mrb[0].mxu0
    %v1757 = vadd.f32 %v1672, %v1756
    %v1758 = vpop.f32.mrb[0].mxu0
    %v1759 = vadd.f32 %v1674, %v1758
    %v1760 = vpop.f32.mrb[0].mxu0
    %v1761 = vpop.f32.mrb[0].mxu0
    %1762 = vdwg.mxu0
    %1763 = vmatprep.subr.bf16.mxu0 %v392
    %1764 = vmatpush1.bf16.msra.mxu0 %v391
    %1765 = vmatprep.subr.bf16.mxu0 %v396
    %1766 = vmatpush1.bf16.msra.mxu0 %v395
    %1767 = vmatprep.subr.bf16.mxu0 0
    %1768 = vmatpush1.bf16.msra.mxu0 0
    %1769 = vmatprep.subr.bf16.mxu0 0
    %1770 = vmatpush1.bf16.msra.mxu0 0
    %1771 = vmatprep.subr.bf16.mxu0 0
    %1772 = vmatpush1.bf16.msra.mxu0 0
    %1773 = vmatprep.subr.bf16.mxu0 0
    %1774 = vmatpush1.bf16.msra.mxu0 0
    %1775 = vmatprep.subr.bf16.mxu0 0
    %1776 = vmatpush1.bf16.msra.mxu0 0
    %1777 = vmatprep.subr.bf16.mxu0 0
    %1778 = vmatpush1.bf16.msra.mxu0 0
    %1779 = vmatprep.subr.bf16.mxu0 0
    %1780 = vmatpush1.bf16.msra.mxu0 0
    %1781 = vmatprep.subr.bf16.mxu0 0
    %1782 = vmatpush1.bf16.msra.mxu0 0
    %1783 = vmatprep.subr.bf16.mxu0 0
    %1784 = vmatpush1.bf16.msra.mxu0 0
    %1785 = vmatprep.subr.bf16.mxu0 0
    %1786 = vmatpush1.bf16.msra.mxu0 0
    %1787 = vmatprep.subr.bf16.mxu0 0
    %1788 = vmatpush1.bf16.msra.mxu0 0
    %1789 = vmatprep.subr.bf16.mxu0 0
    %1790 = vmatpush1.bf16.msra.mxu0 0
    %1791 = vmatprep.subr.bf16.mxu0 0
    %1792 = vmatpush1.bf16.msra.mxu0 0
    %1793 = vmatprep.subr.bf16.mxu0 0
    %1794 = vmatpush1.bf16.msra.mxu0 0
    %1795 = vmatprep.mubr.bf16.mxu0 0
    %1796 = vmatmul.mubr.bf16.gmra.mrb[0].mxu0 %v1720
    %v1797 = vpop.f32.mrb[0].mxu0
    %v1798 = vadd.f32 %v1713, %v1797
    %v1799 = vpop.f32.mrb[0].mxu0
    %v1800 = vadd.f32 %v1715, %v1799
    %v1801 = vpop.f32.mrb[0].mxu0
    %v1802 = vpop.f32.mrb[0].mxu0
    %1803 = vdwg.mxu0
    %v1804 = vadd.f32 %v1757, %v101
    %v1805 = vadd.f32 %v1759, %v105
    %v1806 = vadd.f32 %v1798, %v109
    %v1807 = vadd.f32 %v1800, %v113
    %v1808 = vxor.u32 %v1804, 2147483648
    %v1809 = vmul.f32 %v1808, 1.442695
    %v1810 = vpow.pop %v1809
    %v1811 = vadd.f32 %v1810, 1.0
    %v1812 = vrcp.pop %v1811
    %v1813 = vmul.f32 1.0, %v1812
    %v1814 = vxor.u32 %v1805, 2147483648
    %v1815 = vmul.f32 %v1814, 1.442695
    %v1816 = vpow.pop %v1815
    %v1817 = vadd.f32 %v1816, 1.0
    %v1818 = vrcp.pop %v1817
    %v1819 = vmul.f32 1.0, %v1818
    %v1820 = vtanh.pop %v1806
    %v1821 = vxor.u32 %v1807, 2147483648
    %v1822 = vmul.f32 %v1821, 1.442695
    %v1823 = vpow.pop %v1822
    %v1824 = vadd.f32 %v1823, 1.0
    %v1825 = vrcp.pop %v1824
    %v1826 = vmul.f32 1.0, %v1825
    %v1827 = vmul.f32 %v1819, %v1626
    %v1828 = vmul.f32 %v1813, %v1820
    %v1829 = vadd.f32 %v1827, %v1828
    %v1830 = vtanh.pop %v1829
    %v1831 = vmul.f32 %v1826, %v1830
    %1833 = vset.pattern.permute.xlu0 0
    %1834 = vperm.xlu0 %1833, %v1636
    %v1835 = vpop.permute.xlu0 %1834
    %v1837 = vmul.f32 %v1835, %v1829
    %v1838 = vsub.f32 1.0, %v1636
    %1840 = vset.pattern.permute.xlu0 0
    %1841 = vperm.xlu0 %1840, %v1838
    %v1842 = vpop.permute.xlu0 %1841
    %v1844 = vmul.f32 %v1842, %v1626
    %v1845 = vadd.f32 %v1837, %v1844
    %v1846 = vmul.f32 %v1835, %v1831
    %v1847 = vmul.f32 %v1842, %v1629
    %v1848 = vadd.f32 %v1846, %v1847
    %v1849 = vpack.c.bf16 %v1848, %v1848
    %s1850 = scalar_lea.vmem [#allocation9], 24
    %1851 = vst [vmem:[%s1850] sm:$0xf] %v1849
    %s1852 = scalar_lea.vmem [#allocation4], 28
    %v1853 = vld [vmem:[%s1852] sm:$0xf]
    %s1854 = scalar_lea.vmem %s1, 56
    %v1855 = vld [vmem:[%s1854] sm:$0xff]
    %1856 = vmatprep.subr.bf16.mxu0 %v220
    %1857 = vmatpush1.bf16.msra.mxu0 %v219
    %1858 = vmatprep.subr.bf16.mxu0 %v224
    %1859 = vmatpush1.bf16.msra.mxu0 %v223
    %1860 = vmatprep.subr.bf16.mxu0 %v228
    %1861 = vmatpush1.bf16.msra.mxu0 %v227
    %1862 = vmatprep.subr.bf16.mxu0 %v232
    %1863 = vmatpush1.bf16.msra.mxu0 %v231
    %1864 = vmatprep.subr.bf16.mxu0 %v236
    %1865 = vmatpush1.bf16.msra.mxu0 %v235
    %1866 = vmatprep.subr.bf16.mxu0 %v240
    %1867 = vmatpush1.bf16.msra.mxu0 %v239
    %1868 = vmatprep.subr.bf16.mxu0 %v244
    %1869 = vmatpush1.bf16.msra.mxu0 %v243
    %1870 = vmatprep.subr.bf16.mxu0 %v248
    %1871 = vmatpush1.bf16.msra.mxu0 %v247
    %1872 = vmatprep.subr.bf16.mxu0 0
    %1873 = vmatpush1.bf16.msra.mxu0 0
    %1874 = vmatprep.subr.bf16.mxu0 0
    %1875 = vmatpush1.bf16.msra.mxu0 0
    %1876 = vmatprep.subr.bf16.mxu0 0
    %1877 = vmatpush1.bf16.msra.mxu0 0
    %1878 = vmatprep.subr.bf16.mxu0 0
    %1879 = vmatpush1.bf16.msra.mxu0 0
    %1880 = vmatprep.subr.bf16.mxu0 0
    %1881 = vmatpush1.bf16.msra.mxu0 0
    %1882 = vmatprep.subr.bf16.mxu0 0
    %1883 = vmatpush1.bf16.msra.mxu0 0
    %1884 = vmatprep.subr.bf16.mxu0 0
    %1885 = vmatpush1.bf16.msra.mxu0 0
    %1886 = vmatprep.subr.bf16.mxu0 0
    %1887 = vmatpush1.bf16.msra.mxu0 0
    %1888 = vmatprep.mubr.bf16.mxu0 0
    %1889 = vmatmul.mubr.bf16.gmra.mrb[0].mxu0 %v1849
    %v1890 = vpop.f32.mrb[0].mxu0
    %v1891 = vadd.f32 0.0, %v1890
    %v1892 = vpop.f32.mrb[0].mxu0
    %v1893 = vadd.f32 0.0, %v1892
    %v1894 = vpop.f32.mrb[0].mxu0
    %v1895 = vpop.f32.mrb[0].mxu0
    %1896 = vdwg.mxu0
    %1897 = vmatprep.subr.bf16.mxu0 %v222
    %1898 = vmatpush1.bf16.msra.mxu0 %v221
    %1899 = vmatprep.subr.bf16.mxu0 %v226
    %1900 = vmatpush1.bf16.msra.mxu0 %v225
    %1901 = vmatprep.subr.bf16.mxu0 %v230
    %1902 = vmatpush1.bf16.msra.mxu0 %v229
    %1903 = vmatprep.subr.bf16.mxu0 %v234
    %1904 = vmatpush1.bf16.msra.mxu0 %v233
    %1905 = vmatprep.subr.bf16.mxu0 %v238
    %1906 = vmatpush1.bf16.msra.mxu0 %v237
    %1907 = vmatprep.subr.bf16.mxu0 %v242
    %1908 = vmatpush1.bf16.msra.mxu0 %v241
    %1909 = vmatprep.subr.bf16.mxu0 %v246
    %1910 = vmatpush1.bf16.msra.mxu0 %v245
    %1911 = vmatprep.subr.bf16.mxu0 %v250
    %1912 = vmatpush1.bf16.msra.mxu0 %v249
    %1913 = vmatprep.subr.bf16.mxu0 0
    %1914 = vmatpush1.bf16.msra.mxu0 0
    %1915 = vmatprep.subr.bf16.mxu0 0
    %1916 = vmatpush1.bf16.msra.mxu0 0
    %1917 = vmatprep.subr.bf16.mxu0 0
    %1918 = vmatpush1.bf16.msra.mxu0 0
    %1919 = vmatprep.subr.bf16.mxu0 0
    %1920 = vmatpush1.bf16.msra.mxu0 0
    %1921 = vmatprep.subr.bf16.mxu0 0
    %1922 = vmatpush1.bf16.msra.mxu0 0
    %1923 = vmatprep.subr.bf16.mxu0 0
    %1924 = vmatpush1.bf16.msra.mxu0 0
    %1925 = vmatprep.subr.bf16.mxu0 0
    %1926 = vmatpush1.bf16.msra.mxu0 0
    %1927 = vmatprep.subr.bf16.mxu0 0
    %1928 = vmatpush1.bf16.msra.mxu0 0
    %1929 = vmatprep.mubr.bf16.mxu0 0
    %1930 = vmatmul.mubr.bf16.gmra.mrb[0].mxu0 %v1849
    %v1931 = vpop.f32.mrb[0].mxu0
    %v1932 = vadd.f32 0.0, %v1931
    %v1933 = vpop.f32.mrb[0].mxu0
    %v1934 = vadd.f32 0.0, %v1933
    %v1935 = vpop.f32.mrb[0].mxu0
    %v1936 = vpop.f32.mrb[0].mxu0
    %1937 = vdwg.mxu0
    %v1939 = vsel %vm405, %v1853, 0
    %1941 = vmatprep.subr.bf16.mxu0 %v390
    %1942 = vmatpush1.bf16.msra.mxu0 %v389
    %1943 = vmatprep.subr.bf16.mxu0 %v394
    %1944 = vmatpush1.bf16.msra.mxu0 %v393
    %1945 = vmatprep.subr.bf16.mxu0 0
    %1946 = vmatpush1.bf16.msra.mxu0 0
    %1947 = vmatprep.subr.bf16.mxu0 0
    %1948 = vmatpush1.bf16.msra.mxu0 0
    %1949 = vmatprep.subr.bf16.mxu0 0
    %1950 = vmatpush1.bf16.msra.mxu0 0
    %1951 = vmatprep.subr.bf16.mxu0 0
    %1952 = vmatpush1.bf16.msra.mxu0 0
    %1953 = vmatprep.subr.bf16.mxu0 0
    %1954 = vmatpush1.bf16.msra.mxu0 0
    %1955 = vmatprep.subr.bf16.mxu0 0
    %1956 = vmatpush1.bf16.msra.mxu0 0
    %1957 = vmatprep.subr.bf16.mxu0 0
    %1958 = vmatpush1.bf16.msra.mxu0 0
    %1959 = vmatprep.subr.bf16.mxu0 0
    %1960 = vmatpush1.bf16.msra.mxu0 0
    %1961 = vmatprep.subr.bf16.mxu0 0
    %1962 = vmatpush1.bf16.msra.mxu0 0
    %1963 = vmatprep.subr.bf16.mxu0 0
    %1964 = vmatpush1.bf16.msra.mxu0 0
    %1965 = vmatprep.subr.bf16.mxu0 0
    %1966 = vmatpush1.bf16.msra.mxu0 0
    %1967 = vmatprep.subr.bf16.mxu0 0
    %1968 = vmatpush1.bf16.msra.mxu0 0
    %1969 = vmatprep.subr.bf16.mxu0 0
    %1970 = vmatpush1.bf16.msra.mxu0 0
    %1971 = vmatprep.subr.bf16.mxu0 0
    %1972 = vmatpush1.bf16.msra.mxu0 0
    %1973 = vmatprep.mubr.bf16.mxu0 0
    %1974 = vmatmul.mubr.bf16.gmra.mrb[0].mxu0 %v1939
    %v1975 = vpop.f32.mrb[0].mxu0
    %v1976 = vadd.f32 %v1891, %v1975
    %v1977 = vpop.f32.mrb[0].mxu0
    %v1978 = vadd.f32 %v1893, %v1977
    %v1979 = vpop.f32.mrb[0].mxu0
    %v1980 = vpop.f32.mrb[0].mxu0
    %1981 = vdwg.mxu0
    %1982 = vmatprep.subr.bf16.mxu0 %v392
    %1983 = vmatpush1.bf16.msra.mxu0 %v391
    %1984 = vmatprep.subr.bf16.mxu0 %v396
    %1985 = vmatpush1.bf16.msra.mxu0 %v395
    %1986 = vmatprep.subr.bf16.mxu0 0
    %1987 = vmatpush1.bf16.msra.mxu0 0
    %1988 = vmatprep.subr.bf16.mxu0 0
    %1989 = vmatpush1.bf16.msra.mxu0 0
    %1990 = vmatprep.subr.bf16.mxu0 0
    %1991 = vmatpush1.bf16.msra.mxu0 0
    %1992 = vmatprep.subr.bf16.mxu0 0
    %1993 = vmatpush1.bf16.msra.mxu0 0
    %1994 = vmatprep.subr.bf16.mxu0 0
    %1995 = vmatpush1.bf16.msra.mxu0 0
    %1996 = vmatprep.subr.bf16.mxu0 0
    %1997 = vmatpush1.bf16.msra.mxu0 0
    %1998 = vmatprep.subr.bf16.mxu0 0
    %1999 = vmatpush1.bf16.msra.mxu0 0
    %2000 = vmatprep.subr.bf16.mxu0 0
    %2001 = vmatpush1.bf16.msra.mxu0 0
    %2002 = vmatprep.subr.bf16.mxu0 0
    %2003 = vmatpush1.bf16.msra.mxu0 0
    %2004 = vmatprep.subr.bf16.mxu0 0
    %2005 = vmatpush1.bf16.msra.mxu0 0
    %2006 = vmatprep.subr.bf16.mxu0 0
    %2007 = vmatpush1.bf16.msra.mxu0 0
    %2008 = vmatprep.subr.bf16.mxu0 0
    %2009 = vmatpush1.bf16.msra.mxu0 0
    %2010 = vmatprep.subr.bf16.mxu0 0
    %2011 = vmatpush1.bf16.msra.mxu0 0
    %2012 = vmatprep.subr.bf16.mxu0 0
    %2013 = vmatpush1.bf16.msra.mxu0 0
    %2014 = vmatprep.mubr.bf16.mxu0 0
    %2015 = vmatmul.mubr.bf16.gmra.mrb[0].mxu0 %v1939
    %v2016 = vpop.f32.mrb[0].mxu0
    %v2017 = vadd.f32 %v1932, %v2016
    %v2018 = vpop.f32.mrb[0].mxu0
    %v2019 = vadd.f32 %v1934, %v2018
    %v2020 = vpop.f32.mrb[0].mxu0
    %v2021 = vpop.f32.mrb[0].mxu0
    %2022 = vdwg.mxu0
    %v2023 = vadd.f32 %v1976, %v101
    %v2024 = vadd.f32 %v1978, %v105
    %v2025 = vadd.f32 %v2017, %v109
    %v2026 = vadd.f32 %v2019, %v113
    %v2027 = vxor.u32 %v2023, 2147483648
    %v2028 = vmul.f32 %v2027, 1.442695
    %v2029 = vpow.pop %v2028
    %v2030 = vadd.f32 %v2029, 1.0
    %v2031 = vrcp.pop %v2030
    %v2032 = vmul.f32 1.0, %v2031
    %v2033 = vxor.u32 %v2024, 2147483648
    %v2034 = vmul.f32 %v2033, 1.442695
    %v2035 = vpow.pop %v2034
    %v2036 = vadd.f32 %v2035, 1.0
    %v2037 = vrcp.pop %v2036
    %v2038 = vmul.f32 1.0, %v2037
    %v2039 = vtanh.pop %v2025
    %v2040 = vxor.u32 %v2026, 2147483648
    %v2041 = vmul.f32 %v2040, 1.442695
    %v2042 = vpow.pop %v2041
    %v2043 = vadd.f32 %v2042, 1.0
    %v2044 = vrcp.pop %v2043
    %v2045 = vmul.f32 1.0, %v2044
    %v2046 = vmul.f32 %v2038, %v1845
    %v2047 = vmul.f32 %v2032, %v2039
    %v2048 = vadd.f32 %v2046, %v2047
    %v2049 = vtanh.pop %v2048
    %v2050 = vmul.f32 %v2045, %v2049
    %2052 = vset.pattern.permute.xlu0 0
    %2053 = vperm.xlu0 %2052, %v1855
    %v2054 = vpop.permute.xlu0 %2053
    %v2056 = vmul.f32 %v2054, %v2048
    %v2057 = vsub.f32 1.0, %v1855
    %2059 = vset.pattern.permute.xlu0 0
    %2060 = vperm.xlu0 %2059, %v2057
    %v2061 = vpop.permute.xlu0 %2060
    %v2063 = vmul.f32 %v2061, %v1845
    %v2064 = vadd.f32 %v2056, %v2063
    %v2065 = vmul.f32 %v2054, %v2050
    %v2066 = vmul.f32 %v2061, %v1848
    %v2067 = vadd.f32 %v2065, %v2066
    %v2068 = vpack.c.bf16 %v2067, %v2067
    %s2069 = scalar_lea.vmem [#allocation9], 28
    %2070 = vst [vmem:[%s2069] sm:$0xf] %v2068
    %2071 = vst [vmem:[#allocation2] sm:$0xff] %v2067
    %2072 = vst [vmem:[#allocation3] sm:$0xff] %v2064
    // Predicated region
    $region34: #{tpu_custom_call.1} parent=1 // pred_check
      _
    $region35: #{tpu_custom_call.1} parent=1 // pred_check_branch
      %2074 = sbr.rel (0) target = $region37
    $region36: #{tpu_custom_call.1} parent=1 // pred_region
      %s2076 = ssub.s32 512, 512
      %2077 = vsyncadd [#allocation6], %s2076
      %s2078 = sshll.u32 [#allocation9], 4
      %s2079 = int_to_ptr.vmem [resolvable:$true] %s2078
      %2084 = dma.vmem_to_hbm [thread:$0]  %s2079, 512, %s5, [#allocation6], 64, 64, 4
    $region37: #{tpu_custom_call.1} parent=1 // pred_fallthru
      _
    // Predicated region
    $region38: #{tpu_custom_call.1} parent=1 // pred_check
      _
    $region39: #{tpu_custom_call.1} parent=1 // pred_check_branch
      %2086 = sbr.rel (0) target = $region41
    $region40: #{tpu_custom_call.1} parent=1 // pred_region
      %2087 = dma.done [#allocation6], 512
    $region41: #{tpu_custom_call.1} parent=1 // pred_fallthru
      _
    %2088 = vsyncpa [#allocation5], 1
    %2089 = vsyncpa [#allocation8], 1
    %2090 = vsyncpa [#allocation6], 1

</llo_original>
